<compile_context>
chip_gen: v7x
topology: tpu7x:2x2x1
jax: 0.10.0
libtpu: 0.0.40
codegen_flags: <defaults>
</compile_context>

<pallas_src>
import numpy as np
import jax
import jax.numpy as jnp
from jax.experimental import pallas as pl
from jax.experimental.pallas import tpu as pltpu

# ---------------- static network / packing layout ----------------
N_NODES = 8            # nodes per sample; also the zero-padded input-feature width
HID = 32               # conv hidden width == parameter-pack lane width
FC_HID = 16            # fc1 output width (zero-padded to HID lanes in the pack)
N_CLASSES = 2

GROUP = 16             # samples per grid step -> M = 128 stacked node rows per step
# TODO(synk): on v6e/v7x, GROUP=32 (M=256) fills the 256x256 MXU; 16 matches v5e's native
# 128-row tile and is a safe, efficient default on every chip.
M_TILE = GROUP * N_NODES        # 128
OUT_LANES = 128                 # lane-dense output tile width (unmasked full-tile vst)

# parameter-pack row offsets (all 8-row aligned), lane width = HID
P_C1W1 = 0            # (8, 32)   conv1.w1, rows >= in_features stay zero
P_C1W2 = 8            # (8, 32)   conv1.w2
P_C1B  = 16           # (1, 32)
P_C2W1 = 24           # (32, 32)  conv2.w1
P_C2W2 = 56           # (32, 32)  conv2.w2
P_C2B  = 88           # (1, 32)
P_FC1W = 96           # (32, 32)  lanes [FC_HID:] zero
P_FC1B = 128          # (1, 32)
P_OUTW = 136          # (32, 32)  only [:FC_HID, :N_CLASSES] nonzero
P_OUTB = 168          # (1, 32)
P_ROWS = 176


# ---------------- kernel ----------------
def node_network_kernel(x_ref, a_ref, bm_ref, par_ref, out_ref):
    f32 = jnp.float32
    xp = x_ref[...]                                   # (128, 8)   stacked X, features padded
    a  = a_ref[...]                                   # (128, 128) block-diagonal adjacency
    bm = bm_ref[...]                                  # (128, 128) block-diagonal batch matrix

    w11 = par_ref[P_C1W1:P_C1W1 + N_NODES, :]         # (8, 32)
    w12 = par_ref[P_C1W2:P_C1W2 + N_NODES, :]         # (8, 32)
    b1  = par_ref[P_C1B:P_C1B + 1, :]                 # (1, 32)
    w21 = par_ref[P_C2W1:P_C2W1 + HID, :]             # (32, 32)
    w22 = par_ref[P_C2W2:P_C2W2 + HID, :]             # (32, 32)
    b2  = par_ref[P_C2B:P_C2B + 1, :]
    wfc = par_ref[P_FC1W:P_FC1W + HID, :]             # (32, 32) lanes [16:] zero
    bfc = par_ref[P_FC1B:P_FC1B + 1, :]
    wo  = par_ref[P_OUTW:P_OUTW + HID, :]             # (32, 32) only [:16, :2] nonzero
    bo  = par_ref[P_OUTB:P_OUTB + 1, :]

    # ---- conv1: relu(X @ w1 + (A @ X) @ w2 + b) ----
    ax = jnp.dot(a, xp, preferred_element_type=f32)                      # (128, 8)
    h = (jnp.dot(xp, w11, preferred_element_type=f32)
         + jnp.dot(ax, w12, preferred_element_type=f32) + b1)
    h = jnp.maximum(h, 0.0)                                              # (128, 32)

    # ---- conv2 ----
    ah = jnp.dot(a, h, preferred_element_type=f32)                       # (128, 32)
    h = (jnp.dot(h, w21, preferred_element_type=f32)
         + jnp.dot(ah, w22, preferred_element_type=f32) + b2)
    h = jnp.maximum(h, 0.0)                                              # (128, 32)

    # ---- global sum pool: block-diagonal batch_mat @ H ----
    pooled = jnp.dot(bm, h, preferred_element_type=f32)                  # (128, 32)

    # ---- fc1 + relu (zero-padded weight lanes keep extra lanes exactly 0) ----
    f = jnp.maximum(jnp.dot(pooled, wfc, preferred_element_type=f32) + bfc, 0.0)

    # ---- output head: only lanes 0..1 carry real logits ----
    logits = jnp.dot(f, wo, preferred_element_type=f32) + bo             # (128, 32)

    # 2-way softmax == sigmoid of the logit difference (no cross-lane reductions)
    d = logits[:, 0:1] - logits[:, 1:2]                                  # (128, 1)
    p0 = 1.0 / (1.0 + jnp.exp(-d))
    p1 = 1.0 - p0

    # lane-dense full-tile store; real values live at per-sample rows, lanes [0:2]
    lane = jax.lax.broadcasted_iota(jnp.int32, (M_TILE, OUT_LANES), 1)
    out_ref[...] = jnp.where(lane == 0, p0, jnp.where(lane == 1, p1, 0.0))


# ---------------- wrapper ----------------
def node_network_forward(x_pack, a_pack, bm_pack, params_packed):
    n_steps = x_pack.shape[0] // M_TILE
    return pl.pallas_call(
        node_network_kernel,
        out_shape=jax.ShapeDtypeStruct((n_steps * M_TILE, OUT_LANES), jnp.float32),
        grid=(n_steps,),
        in_specs=[
            pl.BlockSpec((M_TILE, N_NODES), lambda g: (g, 0)),   # stacked X
            pl.BlockSpec((M_TILE, M_TILE), lambda g: (g, 0)),    # block-diag A
            pl.BlockSpec((M_TILE, M_TILE), lambda g: (g, 0)),    # block-diag batch_mat
            pl.BlockSpec((P_ROWS, HID), lambda g: (0, 0)),       # params: resident across grid
        ],
        out_specs=pl.BlockSpec((M_TILE, OUT_LANES), lambda g: (g, 0)),
        compiler_params=pltpu.CompilerParams(
            dimension_semantics=("parallel",)),                   # shard grid over v7x's 2 TCs
    )(x_pack, a_pack, bm_pack, params_packed)


def extract_sample(out_padded, sample_idx, num_graphs):
    # num_graphs must stay a static Python int (host-side slice).
    step, slot = divmod(sample_idx, GROUP)
    r0 = step * M_TILE + slot * N_NODES
    return out_padded[r0:r0 + num_graphs, :N_CLASSES]


# ---------------- host-side packing (done once, outside the hot path) ----------------
def pack_samples(samples):
    """samples: list of (X (N,F), A (N,N), batch_mat (B,N)); returns stacked/block-diag packs."""
    G = len(samples)
    n_steps = -(-G // GROUP)
    rows = n_steps * M_TILE
    xs = np.zeros((rows, N_NODES), np.float32)
    aa = np.zeros((rows, M_TILE), np.float32)
    bb = np.zeros((rows, M_TILE), np.float32)
    for g, (X, A, BM) in enumerate(samples):
        X, A, BM = np.asarray(X), np.asarray(A), np.asarray(BM)
        N, F = X.shape
        B = BM.shape[0]
        assert N <= N_NODES and F <= N_NODES and B <= N_NODES
        step, slot = divmod(g, GROUP)
        r0 = step * M_TILE + slot * N_NODES
        c0 = slot * N_NODES
        xs[r0:r0 + N, :F] = X
        aa[r0:r0 + N, c0:c0 + N] = A
        bb[r0:r0 + B, c0:c0 + N] = BM
    return jnp.asarray(xs), jnp.asarray(aa), jnp.asarray(bb)


def pack_params(p, input_features):
    F = input_features
    pack = np.zeros((P_ROWS, HID), np.float32)
    pack[P_C1W1:P_C1W1 + F, :] = np.asarray(p["conv1_w1"])
    pack[P_C1W2:P_C1W2 + F, :] = np.asarray(p["conv1_w2"])
    pack[P_C1B, :] = np.asarray(p["conv1_b"])[0]
    pack[P_C2W1:P_C2W1 + HID, :] = np.asarray(p["conv2_w1"])
    pack[P_C2W2:P_C2W2 + HID, :] = np.asarray(p["conv2_w2"])
    pack[P_C2B, :] = np.asarray(p["conv2_b"])[0]
    pack[P_FC1W:P_FC1W + HID, 0:FC_HID] = np.asarray(p["fc1_w"])
    pack[P_FC1B, 0:FC_HID] = np.asarray(p["fc1_b"])[0]
    pack[P_OUTW:P_OUTW + FC_HID, 0:N_CLASSES] = np.asarray(p["out_w"])
    pack[P_OUTB, 0:N_CLASSES] = np.asarray(p["out_b"])[0]
    return jnp.asarray(pack)


def init_params(key, input_features):
    ks = jax.random.split(key, 10)
    # torch.rand -> U[0, 1) for the GNN conv params
    conv1_w1 = jax.random.uniform(ks[0], (input_features, 32), jnp.float32)
    conv1_w2 = jax.random.uniform(ks[1], (input_features, 32), jnp.float32)
    conv1_b = jax.random.uniform(ks[2], (1, 32), jnp.float32)
    conv2_w1 = jax.random.uniform(ks[3], (32, 32), jnp.float32)
    conv2_w2 = jax.random.uniform(ks[4], (32, 32), jnp.float32)
    conv2_b = jax.random.uniform(ks[5], (1, 32), jnp.float32)
    # torch Linear default: U(-1/sqrt(in), 1/sqrt(in)); stored transposed as [in, out]
    lim1 = 1.0 / jnp.sqrt(32.0)
    fc1_w = jax.random.uniform(ks[6], (32, 16), jnp.float32, -lim1, lim1)
    fc1_b = jax.random.uniform(ks[7], (1, 16), jnp.float32, -lim1, lim1)
    lim2 = 1.0 / jnp.sqrt(16.0)
    out_w = jax.random.uniform(ks[8], (16, 2), jnp.float32, -lim2, lim2)
    out_b = jax.random.uniform(ks[9], (1, 2), jnp.float32, -lim2, lim2)
    return dict(
        conv1_w1=conv1_w1, conv1_w2=conv1_w2, conv1_b=conv1_b,
        conv2_w1=conv2_w1, conv2_w2=conv2_w2, conv2_b=conv2_b,
        fc1_w=fc1_w, fc1_b=fc1_b, out_w=out_w, out_b=out_b,
    )


def reference_forward(X, A, batch_mat, p):
    h = jnp.maximum(X @ p["conv1_w1"] + (A @ X) @ p["conv1_w2"] + p["conv1_b"], 0.0)
    h = jnp.maximum(h @ p["conv2_w1"] + (A @ h) @ p["conv2_w2"] + p["conv2_b"], 0.0)
    pooled = batch_mat @ h
    f = jnp.maximum(pooled @ p["fc1_w"] + p["fc1_b"], 0.0)
    logits = f @ p["out_w"] + p["out_b"]
    return jax.nn.softmax(logits, axis=1)


if __name__ == "__main__":
    key = jax.random.PRNGKey(0)
    k_p, k_data = jax.random.split(key)

    F_IN, B_GRAPHS = 4, 2          # 8 nodes, 4 input features, 2 graphs per batch_mat
    params = init_params(k_p, F_IN)
    params_packed = pack_params(params, F_IN)

    # 32 independent samples (each = one module forward call) -> 2 grid steps of 16 samples.
    NUM_SAMPLES = 32
    samples = []
    for sk in jax.random.split(k_data, NUM_SAMPLES):
        k_x, k_a = jax.random.split(sk)
        X = jax.random.normal(k_x, (N_NODES, F_IN), jnp.float32)
        raw = jax.random.uniform(k_a, (N_NODES, N_NODES), jnp.float32)
        A = ((raw + raw.T) * 0.5 > 0.5).astype(jnp.float32)
        A = jnp.clip(A + jnp.eye(N_NODES, dtype=jnp.float32), 0.0, 1.0)
        # batch membership: first 4 nodes -> graph 0, last 4 -> graph 1
        batch_mat = jnp.concatenate(
            [jnp.concatenate([jnp.ones((1, 4)), jnp.zeros((1, 4))], axis=1),
             jnp.concatenate([jnp.zeros((1, 4)), jnp.ones((1, 4))], axis=1)],
            axis=0).astype(jnp.float32)
        samples.append((X, A, batch_mat))

    x_pack, a_pack, bm_pack = pack_samples(samples)
    out = jax.block_until_ready(
        node_network_forward(x_pack, a_pack, bm_pack, params_packed))

    for g, (X, A, BM) in enumerate(samples):
        got = extract_sample(out, g, BM.shape[0])
        ref = reference_forward(X, A, BM, params)
        assert got.shape == (B_GRAPHS, N_CLASSES)
        assert jnp.allclose(got, ref, atol=1e-4, rtol=1e-4), (g, got, ref)
        assert jnp.allclose(jnp.sum(got, axis=1), 1.0, atol=1e-5)

    print("KERNEL_OK")
</pallas_src>

<mosaic_0001>
module attributes {stable_mosaic.version = 11 : i64} {
  func.func @node_network_kernel(%arg0: i32, %arg1: memref<128x8xf32, #tpu.memory_space<vmem>>, %arg2: memref<128x128xf32, #tpu.memory_space<vmem>>, %arg3: memref<128x128xf32, #tpu.memory_space<vmem>>, %arg4: memref<176x32xf32, #tpu.memory_space<vmem>>, %arg5: memref<128x128xf32, #tpu.memory_space<vmem>>) attributes {dimension_semantics = [#tpu.dimension_semantics<parallel>], iteration_bounds = array<i64: 2>, scalar_prefetch = 0 : i64, scratch_operands = 0 : i64, tpu.core_type = #tpu.core_type<tc>, window_params = [{transform_indices = @transform_0, window_bounds = array<i64: 128, 8>}, {transform_indices = @transform_1, window_bounds = array<i64: 128, 128>}, {transform_indices = @transform_2, window_bounds = array<i64: 128, 128>}, {pipeline_mode = #tpu.pipeline_mode<synchronous>, transform_indices = @transform_3, window_bounds = array<i64: 176, 32>}, {transform_indices = @transform_4, window_bounds = array<i64: 128, 128>}]} {
    %c0 = arith.constant 0 : index
    %c0_0 = arith.constant 0 : index
    %0 = vector.load %arg1[%c0, %c0_0] : memref<128x8xf32, #tpu.memory_space<vmem>>, vector<128x8xf32>
    %c0_1 = arith.constant 0 : index
    %c0_2 = arith.constant 0 : index
    %1 = vector.load %arg2[%c0_1, %c0_2] : memref<128x128xf32, #tpu.memory_space<vmem>>, vector<128x128xf32>
    %c0_3 = arith.constant 0 : index
    %c0_4 = arith.constant 0 : index
    %2 = vector.load %arg3[%c0_3, %c0_4] : memref<128x128xf32, #tpu.memory_space<vmem>>, vector<128x128xf32>
    %c0_5 = arith.constant 0 : index
    %c0_6 = arith.constant 0 : index
    %3 = vector.load %arg4[%c0_5, %c0_6] : memref<176x32xf32, #tpu.memory_space<vmem>>, vector<8x32xf32>
    %c8 = arith.constant 8 : index
    %c0_7 = arith.constant 0 : index
    %4 = vector.load %arg4[%c8, %c0_7] : memref<176x32xf32, #tpu.memory_space<vmem>>, vector<8x32xf32>
    %c16 = arith.constant 16 : index
    %c0_8 = arith.constant 0 : index
    %5 = vector.load %arg4[%c16, %c0_8] : memref<176x32xf32, #tpu.memory_space<vmem>>, vector<1x32xf32>
    %c24 = arith.constant 24 : index
    %c0_9 = arith.constant 0 : index
    %6 = vector.load %arg4[%c24, %c0_9] : memref<176x32xf32, #tpu.memory_space<vmem>>, vector<32x32xf32>
    %c56 = arith.constant 56 : index
    %c0_10 = arith.constant 0 : index
    %7 = vector.load %arg4[%c56, %c0_10] : memref<176x32xf32, #tpu.memory_space<vmem>>, vector<32x32xf32>
    %c88 = arith.constant 88 : index
    %c0_11 = arith.constant 0 : index
    %8 = vector.load %arg4[%c88, %c0_11] : memref<176x32xf32, #tpu.memory_space<vmem>>, vector<1x32xf32>
    %c96 = arith.constant 96 : index
    %c0_12 = arith.constant 0 : index
    %9 = vector.load %arg4[%c96, %c0_12] : memref<176x32xf32, #tpu.memory_space<vmem>>, vector<32x32xf32>
    %c128 = arith.constant 128 : index
    %c0_13 = arith.constant 0 : index
    %10 = vector.load %arg4[%c128, %c0_13] : memref<176x32xf32, #tpu.memory_space<vmem>>, vector<1x32xf32>
    %c136 = arith.constant 136 : index
    %c0_14 = arith.constant 0 : index
    %11 = vector.load %arg4[%c136, %c0_14] : memref<176x32xf32, #tpu.memory_space<vmem>>, vector<32x32xf32>
    %c168 = arith.constant 168 : index
    %c0_15 = arith.constant 0 : index
    %12 = vector.load %arg4[%c168, %c0_15] : memref<176x32xf32, #tpu.memory_space<vmem>>, vector<1x32xf32>
    %cst = arith.constant dense<0.000000e+00> : vector<128x8xf32>
    %13 = tpu.matmul %1, %0, %cst {dimension_numbers = #tpu.dot_dimension_numbers<[1], [0], [0], [1], [0, 0, 1, 1], [], []>} : vector<128x128xf32>, vector<128x8xf32>, vector<128x8xf32> -> vector<128x8xf32>
    %cst_16 = arith.constant dense<0.000000e+00> : vector<128x32xf32>
    %14 = tpu.matmul %0, %3, %cst_16 {dimension_numbers = #tpu.dot_dimension_numbers<[1], [0], [0], [1], [0, 0, 1, 1], [], []>} : vector<128x8xf32>, vector<8x32xf32>, vector<128x32xf32> -> vector<128x32xf32>
    %cst_17 = arith.constant dense<0.000000e+00> : vector<128x32xf32>
    %15 = tpu.matmul %13, %4, %cst_17 {dimension_numbers = #tpu.dot_dimension_numbers<[1], [0], [0], [1], [0, 0, 1, 1], [], []>} : vector<128x8xf32>, vector<8x32xf32>, vector<128x32xf32> -> vector<128x32xf32>
    %16 = arith.addf %14, %15 : vector<128x32xf32>
    %17 = vector.broadcast %5 : vector<1x32xf32> to vector<128x32xf32>
    %18 = arith.addf %16, %17 : vector<128x32xf32>
    %cst_18 = arith.constant 0.000000e+00 : f32
    %19 = vector.broadcast %cst_18 : f32 to vector<128x32xf32>
    %20 = arith.maximumf %18, %19 : vector<128x32xf32>
    %cst_19 = arith.constant dense<0.000000e+00> : vector<128x32xf32>
    %21 = tpu.matmul %1, %20, %cst_19 {dimension_numbers = #tpu.dot_dimension_numbers<[1], [0], [0], [1], [0, 0, 1, 1], [], []>} : vector<128x128xf32>, vector<128x32xf32>, vector<128x32xf32> -> vector<128x32xf32>
    %cst_20 = arith.constant dense<0.000000e+00> : vector<128x32xf32>
    %22 = tpu.matmul %20, %6, %cst_20 {dimension_numbers = #tpu.dot_dimension_numbers<[1], [0], [0], [1], [0, 0, 1, 1], [], []>} : vector<128x32xf32>, vector<32x32xf32>, vector<128x32xf32> -> vector<128x32xf32>
    %cst_21 = arith.constant dense<0.000000e+00> : vector<128x32xf32>
    %23 = tpu.matmul %21, %7, %cst_21 {dimension_numbers = #tpu.dot_dimension_numbers<[1], [0], [0], [1], [0, 0, 1, 1], [], []>} : vector<128x32xf32>, vector<32x32xf32>, vector<128x32xf32> -> vector<128x32xf32>
    %24 = arith.addf %22, %23 : vector<128x32xf32>
    %25 = vector.broadcast %8 : vector<1x32xf32> to vector<128x32xf32>
    %26 = arith.addf %24, %25 : vector<128x32xf32>
    %cst_22 = arith.constant 0.000000e+00 : f32
    %27 = vector.broadcast %cst_22 : f32 to vector<128x32xf32>
    %28 = arith.maximumf %26, %27 : vector<128x32xf32>
    %cst_23 = arith.constant dense<0.000000e+00> : vector<128x32xf32>
    %29 = tpu.matmul %2, %28, %cst_23 {dimension_numbers = #tpu.dot_dimension_numbers<[1], [0], [0], [1], [0, 0, 1, 1], [], []>} : vector<128x128xf32>, vector<128x32xf32>, vector<128x32xf32> -> vector<128x32xf32>
    %cst_24 = arith.constant dense<0.000000e+00> : vector<128x32xf32>
    %30 = tpu.matmul %29, %9, %cst_24 {dimension_numbers = #tpu.dot_dimension_numbers<[1], [0], [0], [1], [0, 0, 1, 1], [], []>} : vector<128x32xf32>, vector<32x32xf32>, vector<128x32xf32> -> vector<128x32xf32>
    %31 = vector.broadcast %10 : vector<1x32xf32> to vector<128x32xf32>
    %32 = arith.addf %30, %31 : vector<128x32xf32>
    %cst_25 = arith.constant 0.000000e+00 : f32
    %33 = vector.broadcast %cst_25 : f32 to vector<128x32xf32>
    %34 = arith.maximumf %32, %33 : vector<128x32xf32>
    %cst_26 = arith.constant dense<0.000000e+00> : vector<128x32xf32>
    %35 = tpu.matmul %34, %11, %cst_26 {dimension_numbers = #tpu.dot_dimension_numbers<[1], [0], [0], [1], [0, 0, 1, 1], [], []>} : vector<128x32xf32>, vector<32x32xf32>, vector<128x32xf32> -> vector<128x32xf32>
    %36 = vector.broadcast %12 : vector<1x32xf32> to vector<128x32xf32>
    %37 = arith.addf %35, %36 : vector<128x32xf32>
    %38 = vector.extract_strided_slice %37 {offsets = [0, 0], sizes = [128, 1], strides = [1, 1]} : vector<128x32xf32> to vector<128x1xf32>
    %39 = vector.extract_strided_slice %37 {offsets = [0, 1], sizes = [128, 1], strides = [1, 1]} : vector<128x32xf32> to vector<128x1xf32>
    %40 = arith.subf %38, %39 : vector<128x1xf32>
    %cst_27 = arith.constant 0.000000e+00 : f32
    %41 = vector.broadcast %cst_27 : f32 to vector<128x1xf32>
    %42 = arith.subf %41, %40 : vector<128x1xf32>
    %43 = math.exp %42 : vector<128x1xf32>
    %cst_28 = arith.constant 1.000000e+00 : f32
    %44 = vector.broadcast %cst_28 : f32 to vector<128x1xf32>
    %45 = arith.addf %44, %43 : vector<128x1xf32>
    %cst_29 = arith.constant 1.000000e+00 : f32
    %46 = vector.broadcast %cst_29 : f32 to vector<128x1xf32>
    %47 = arith.divf %46, %45 : vector<128x1xf32>
    %cst_30 = arith.constant 1.000000e+00 : f32
    %48 = vector.broadcast %cst_30 : f32 to vector<128x1xf32>
    %49 = arith.subf %48, %47 : vector<128x1xf32>
    %50 = tpu.iota {dimensions = array<i32: 1>} : vector<128x128xi32>
    %c0_i32 = arith.constant 0 : i32
    %51 = vector.broadcast %c0_i32 : i32 to vector<128x128xi32>
    %52 = arith.cmpi eq, %50, %51 : vector<128x128xi32>
    %c1_i32 = arith.constant 1 : i32
    %53 = vector.broadcast %c1_i32 : i32 to vector<128x128xi32>
    %54 = arith.cmpi eq, %50, %53 : vector<128x128xi32>
    %cst_31 = arith.constant 0.000000e+00 : f32
    %55 = vector.shape_cast %49 : vector<128x1xf32> to vector<128x1xf32>
    %56 = vector.broadcast %55 : vector<128x1xf32> to vector<128x128xf32>
    %57 = vector.broadcast %cst_31 : f32 to vector<128x128xf32>
    %58 = arith.select %54, %56, %57 : vector<128x128xi1>, vector<128x128xf32>
    %59 = vector.shape_cast %47 : vector<128x1xf32> to vector<128x1xf32>
    %60 = vector.broadcast %59 : vector<128x1xf32> to vector<128x128xf32>
    %61 = arith.select %52, %60, %58 : vector<128x128xi1>, vector<128x128xf32>
    %c0_32 = arith.constant 0 : index
    %c0_33 = arith.constant 0 : index
    %62 = vector.load %arg5[%c0_32, %c0_33] : memref<128x128xf32, #tpu.memory_space<vmem>>, vector<128x128xf32>
    tpu.vector_store %arg5[%c0_32, %c0_33], %61 {strides = array<i32>} : memref<128x128xf32, #tpu.memory_space<vmem>>, vector<128x128xf32>,
    return
  }
  func.func @transform_0(%arg0: i32) -> (i32, i32) {
    %c0_i32 = arith.constant 0 : i32
    %c0_i32_0 = arith.constant 0 : i32
    return %arg0, %c0_i32 : i32, i32
  }
  func.func @transform_1(%arg0: i32) -> (i32, i32) {
    %c0_i32 = arith.constant 0 : i32
    %c0_i32_0 = arith.constant 0 : i32
    return %arg0, %c0_i32 : i32, i32
  }
  func.func @transform_2(%arg0: i32) -> (i32, i32) {
    %c0_i32 = arith.constant 0 : i32
    %c0_i32_0 = arith.constant 0 : i32
    return %arg0, %c0_i32 : i32, i32
  }
  func.func @transform_3(%arg0: i32) -> (i32, i32) {
    %c0_i32 = arith.constant 0 : i32
    %c0_i32_0 = arith.constant 0 : i32
    %c0_i32_1 = arith.constant 0 : i32
    return %c0_i32, %c0_i32_0 : i32, i32
  }
  func.func @transform_4(%arg0: i32) -> (i32, i32) {
    %c0_i32 = arith.constant 0 : i32
    %c0_i32_0 = arith.constant 0 : i32
    return %arg0, %c0_i32 : i32, i32
  }
}

</mosaic_0001>

<llo_original>
// kernel: tpu_custom_call.1
$region0: #{tpu_custom_call.1}
  #allocation0 [shape = 'u32[]', space=smem, size = 0x4, offset = 0x4, fixed_abs, tag = 'smem constant byte address 0x4 - core index']
  #allocation1 [shape = 'u32[144,128]{1,0:T(1,128)}', space=vmem, size = 0x12000, scoped, tag = 'internal scratch']
  %s0 = inlined_call_operand.vmem [shape: f32[256,8], index: 0, kind: input, shape index: {}]
  %s1 = inlined_call_operand.vmem [shape: f32[256,128], index: 1, kind: input, shape index: {}]
  %s2 = inlined_call_operand.vmem [shape: f32[256,128], index: 2, kind: input, shape index: {}]
  %s3 = inlined_call_operand.vmem [shape: f32[176,32], index: 3, kind: input, shape index: {}]
  %s4 = inlined_call_operand.hbm [shape: f32[256,128], index: 4, kind: output, shape index: {}]
  %s5 = sld [smem:[#allocation0]]
  $region49: #{tpu_custom_call.1} parent=0
    _
  %s7 = ssub.s32 1, %s5
  %s8 = scalar_select 0, %s7, %s5
  $region1: #{tpu_custom_call.1} parent=0
    #allocation2 [shape = 'u8[131072]{0}', space=vmem, size = 0x20000, scoped, tag = 'output window, operand 0']
    #allocation3 [shape = 's32[2]{0}', space=sflag, size = 0x8, scoped, tag = 'scoped memory for tpu_custom_call.1']
    %9 = vsyncpa [#allocation3], 0
    %s10 = scalar_lea.sflag [#allocation3], 1
    %11 = vsyncpa %s10, 0
    loop: start=0, step=1, limit=4
    $region2: #{tpu_custom_call.1} parent=1 // loop_pre_header
      _
    $region3: #{tpu_custom_call.1} parent=1 // loop_header
      %s13 = sphi 0, %s17
      %p14 = scmp.ge.s32.totalorder %s13, 4
      %s23 = sphi 0, %s25
      %s26 = sphi 0, %s23
      %s27 = sphi 0, %s26
      %s43 = sphi 0, %s27
      %s49 = sphi 0, %s51
      %s52 = sphi 0, %s49
      %s53 = sphi 0, %s52
      %s69 = sphi 0, %s53
      %s75 = sphi 0, %s77
      %s78 = sphi 0, %s75
      %s79 = sphi 0, %s78
      %s95 = sphi 0, %s79
      %s99 = sphi 0, %s99
      %s101 = sphi 0, %s99
      %s102 = sphi 0, %s101
      %s116 = sphi 0, %s102
      %s122 = sphi 0, %s124
      %s125 = sphi 0, %s122
      %s126 = sphi 0, %s125
      %s142 = sphi 0, %s126
    $region4: #{tpu_custom_call.1} parent=1 // loop_header_branch
      %16 = sbr.rel (%p14) target = $region8
    $region5: #{tpu_custom_call.1} parent=1 // loop_body
      %s18 = ssub.s32 %s13, 1
      %s19 = ssub.s32 %s13, 2
      %s20 = sadd.s32 %s13, 1
      %s21 = ssub.s32 %s13, %s20
      %p22 = scmp.eq.s32.totalorder %s21, 0
      %s24 = sadd.s32 %s23, 1
      %s25 = scalar_select %p22, %s23, %s24
      %p28 = pneg %p22
      %p29 = scmp.eq.s32.totalorder %s13, 1
      %p30 = por %p28, %p29
      %p31 = scmp.ne.s32.totalorder %s23, %s26
      %p32 = scmp.eq.s32.totalorder %s13, 0
      %p33 = por %p31, %p32
      %p34 = scmp.ne.s32.totalorder %s23, %s26
      %p35 = scmp.eq.s32.totalorder %s18, 1
      %p36 = por %p34, %p35
      %p37 = scmp.ne.s32.totalorder %s26, %s27
      %p38 = scmp.eq.s32.totalorder %s18, 0
      %p39 = por %p37, %p38
      %p40 = scmp.ne.s32.totalorder %s26, %s27
      %p41 = scmp.eq.s32.totalorder %s19, 1
      %p42 = por %p40, %p41
      %p44 = scmp.ne.s32.totalorder %s27, %s43
      %p45 = scmp.eq.s32.totalorder %s19, 0
      %p46 = por %p44, %p45
      %s47 = ssub.s32 %s13, %s20
      %p48 = scmp.eq.s32.totalorder %s47, 0
      %s50 = sadd.s32 %s49, 1
      %s51 = scalar_select %p48, %s49, %s50
      %p54 = pneg %p48
      %p55 = scmp.eq.s32.totalorder %s13, 1
      %p56 = por %p54, %p55
      %p57 = scmp.ne.s32.totalorder %s49, %s52
      %p58 = scmp.eq.s32.totalorder %s13, 0
      %p59 = por %p57, %p58
      %p60 = scmp.ne.s32.totalorder %s49, %s52
      %p61 = scmp.eq.s32.totalorder %s18, 1
      %p62 = por %p60, %p61
      %p63 = scmp.ne.s32.totalorder %s52, %s53
      %p64 = scmp.eq.s32.totalorder %s18, 0
      %p65 = por %p63, %p64
      %p66 = scmp.ne.s32.totalorder %s52, %s53
      %p67 = scmp.eq.s32.totalorder %s19, 1
      %p68 = por %p66, %p67
      %p70 = scmp.ne.s32.totalorder %s53, %s69
      %p71 = scmp.eq.s32.totalorder %s19, 0
      %p72 = por %p70, %p71
      %s73 = ssub.s32 %s13, %s20
      %p74 = scmp.eq.s32.totalorder %s73, 0
      %s76 = sadd.s32 %s75, 1
      %s77 = scalar_select %p74, %s75, %s76
      %p80 = pneg %p74
      %p81 = scmp.eq.s32.totalorder %s13, 1
      %p82 = por %p80, %p81
      %p83 = scmp.ne.s32.totalorder %s75, %s78
      %p84 = scmp.eq.s32.totalorder %s13, 0
      %p85 = por %p83, %p84
      %p86 = scmp.ne.s32.totalorder %s75, %s78
      %p87 = scmp.eq.s32.totalorder %s18, 1
      %p88 = por %p86, %p87
      %p89 = scmp.ne.s32.totalorder %s78, %s79
      %p90 = scmp.eq.s32.totalorder %s18, 0
      %p91 = por %p89, %p90
      %p92 = scmp.ne.s32.totalorder %s78, %s79
      %p93 = scmp.eq.s32.totalorder %s19, 1
      %p94 = por %p92, %p93
      %p96 = scmp.ne.s32.totalorder %s79, %s95
      %p97 = scmp.eq.s32.totalorder %s19, 0
      %p98 = por %p96, %p97
      %s100 = sadd.s32 %s99, 1
      %p103 = scmp.eq.s32.totalorder %s13, 1
      %p104 = scmp.ne.s32.totalorder %s99, %s101
      %p105 = scmp.eq.s32.totalorder %s13, 0
      %p106 = por %p104, %p105
      %p107 = scmp.ne.s32.totalorder %s99, %s101
      %p108 = scmp.eq.s32.totalorder %s18, 1
      %p109 = por %p107, %p108
      %p110 = scmp.ne.s32.totalorder %s101, %s102
      %p111 = scmp.eq.s32.totalorder %s18, 0
      %p112 = por %p110, %p111
      %p113 = scmp.ne.s32.totalorder %s101, %s102
      %p114 = scmp.eq.s32.totalorder %s19, 1
      %p115 = por %p113, %p114
      %p117 = scmp.ne.s32.totalorder %s102, %s116
      %p118 = scmp.eq.s32.totalorder %s19, 0
      %p119 = por %p117, %p118
      %s120 = ssub.s32 %s13, %s20
      %p121 = scmp.eq.s32.totalorder %s120, 0
      %s123 = sadd.s32 %s122, 1
      %s124 = scalar_select %p121, %s122, %s123
      %p127 = pneg %p121
      %p128 = scmp.eq.s32.totalorder %s13, 1
      %p129 = por %p127, %p128
      %p130 = scmp.ne.s32.totalorder %s122, %s125
      %p131 = scmp.eq.s32.totalorder %s13, 0
      %p132 = por %p130, %p131
      %p133 = scmp.ne.s32.totalorder %s122, %s125
      %p134 = scmp.eq.s32.totalorder %s18, 1
      %p135 = por %p133, %p134
      %p136 = scmp.ne.s32.totalorder %s125, %s126
      %p137 = scmp.eq.s32.totalorder %s18, 0
      %p138 = por %p136, %p137
      %p139 = scmp.ne.s32.totalorder %s125, %s126
      %p140 = scmp.eq.s32.totalorder %s19, 1
      %p141 = por %p139, %p140
      %p143 = scmp.ne.s32.totalorder %s126, %s142
      %p144 = scmp.eq.s32.totalorder %s19, 0
      %p145 = por %p143, %p144
      %p146 = scmp.le.s32.totalorder 1, %s13
      %p147 = scmp.lt.s32.totalorder %s13, 3
      %p148 = pnand %p146, %p147
      %p149 = pneg %p148
      // Predicated region
      $region9: #{tpu_custom_call.1} parent=5 // pred_check
        _
      $region10: #{tpu_custom_call.1} parent=5 // pred_check_branch
        %151 = sbr.rel (%p148) target = $region12
      $region11: #{tpu_custom_call.1} parent=5 // pred_region
        %s152 = ssub.s32 %s13, 1
        // Predicated region
        $region13: #{tpu_custom_call.1} parent=11 // pred_check
          %p153 = pneg %p112
        $region14: #{tpu_custom_call.1} parent=11 // pred_check_branch
          %155 = sbr.rel (%p153) target = $region16
        $region15: #{tpu_custom_call.1} parent=11 // pred_region
          _
        $region16: #{tpu_custom_call.1} parent=11 // pred_fallthru
          _
      $region12: #{tpu_custom_call.1} parent=5 // pred_fallthru
        _
      %p156 = scmp.lt.s32.totalorder %s13, 2
      // Predicated region
      $region17: #{tpu_custom_call.1} parent=5 // pred_check
        %p157 = pneg %p156
      $region18: #{tpu_custom_call.1} parent=5 // pred_check_branch
        %159 = sbr.rel (%p157) target = $region20
      $region19: #{tpu_custom_call.1} parent=5 // pred_region
        // Predicated region
        $region21: #{tpu_custom_call.1} parent=19 // pred_check
          %p160 = pneg %p33
        $region22: #{tpu_custom_call.1} parent=19 // pred_check_branch
          %162 = sbr.rel (%p160) target = $region24
        $region23: #{tpu_custom_call.1} parent=19 // pred_region
          %s163 = smul.u32 16, %s13
          %p164 = scmp.lt.s32.totalorder %s163, 31
          %s165 = scalar_select %p164, %s163, 31
          %s166 = smul.addr %s165, 8
          %s167 = scalar_lea.vmem %s0, %s166
          %s168 = smul.u32 16, %s13
        $region24: #{tpu_custom_call.1} parent=19 // pred_fallthru
          _
        // Predicated region
        $region25: #{tpu_custom_call.1} parent=19 // pred_check
          %p169 = pneg %p59
        $region26: #{tpu_custom_call.1} parent=19 // pred_check_branch
          %171 = sbr.rel (%p169) target = $region28
        $region27: #{tpu_custom_call.1} parent=19 // pred_region
          %s172 = smul.u32 16, %s13
          %p173 = scmp.lt.s32.totalorder %s172, 31
          %s174 = scalar_select %p173, %s172, 31
          %s175 = smul.addr %s174, 8
          %s176 = scalar_lea.vmem %s1, %s175
          %s177 = smul.u32 16, %s13
        $region28: #{tpu_custom_call.1} parent=19 // pred_fallthru
          _
        // Predicated region
        $region29: #{tpu_custom_call.1} parent=19 // pred_check
          %p178 = pneg %p85
        $region30: #{tpu_custom_call.1} parent=19 // pred_check_branch
          %180 = sbr.rel (%p178) target = $region32
        $region31: #{tpu_custom_call.1} parent=19 // pred_region
          %s181 = smul.u32 16, %s13
          %p182 = scmp.lt.s32.totalorder %s181, 31
          %s183 = scalar_select %p182, %s181, 31
          %s184 = smul.addr %s183, 8
          %s185 = scalar_lea.vmem %s2, %s184
          %s186 = smul.u32 16, %s13
        $region32: #{tpu_custom_call.1} parent=19 // pred_fallthru
          _
      $region20: #{tpu_custom_call.1} parent=5 // pred_fallthru
        _
      %p187 = scmp.le.s32.totalorder 1, %s13
      %p188 = scmp.lt.s32.totalorder %s13, 3
      %p189 = pnand %p187, %p188
      %p190 = pneg %p189
      // Predicated region
      $region33: #{tpu_custom_call.1} parent=5 // pred_check
        _
      $region34: #{tpu_custom_call.1} parent=5 // pred_check_branch
        %192 = sbr.rel (%p189) target = $region36
      $region35: #{tpu_custom_call.1} parent=5 // pred_region
        %s193 = ssub.s32 %s13, 1
        %s194 = smul.u32 16, %s18
        %p195 = scmp.lt.s32.totalorder %s194, 31
        %s196 = scalar_select %p195, %s194, 31
        %s197 = smul.addr %s196, 8
        %s198 = scalar_lea.vmem %s0, %s197
        %p199 = pneg %p39
        %p200 = pneg %p36
        %s201 = smul.u32 16, %s18
        %p202 = scmp.lt.s32.totalorder %s201, 31
        %s203 = scalar_select %p202, %s201, 31
        %s204 = smul.addr %s203, 8
        %s205 = scalar_lea.vmem %s1, %s204
        %p206 = pneg %p65
        %p207 = pneg %p62
        %s208 = smul.u32 16, %s18
        %p209 = scmp.lt.s32.totalorder %s208, 31
        %s210 = scalar_select %p209, %s208, 31
        %s211 = smul.addr %s210, 8
        %s212 = scalar_lea.vmem %s2, %s211
        %p213 = pneg %p91
        %p214 = pneg %p88
        %p215 = pneg %p112
        %p216 = pneg %p109
        %p217 = pneg %p138
        %p218 = pneg %p135
        %s219 = sand.u32 %s125, 1
        %s220 = scalar_lea.sflag [#allocation3], %s219
        %s221 = sand.u32 %s125, 1
        %s222 = smul.addr %s221, 128
        %s223 = scalar_lea.vmem [#allocation2], %s222
        %s224 = smul.u32 16, %s18
        %p225 = scmp.lt.s32.totalorder %s224, 31
        %s226 = scalar_select %p225, %s224, 31
        %s227 = smul.addr %s226, 8
        %s228 = scalar_lea.vmem %s0, %s227
        %s229 = smul.u32 16, %s18
        %s230 = smul.u32 16, %s18
        %p231 = scmp.lt.s32.totalorder %s230, 31
        %s232 = scalar_select %p231, %s230, 31
        %s233 = smul.addr %s232, 8
        %s234 = scalar_lea.vmem %s1, %s233
        %s235 = smul.u32 16, %s18
        %s236 = smul.u32 16, %s18
        %p237 = scmp.lt.s32.totalorder %s236, 31
        %s238 = scalar_select %p237, %s236, 31
        %s239 = smul.addr %s238, 8
        %s240 = scalar_lea.vmem %s2, %s239
        %s241 = smul.u32 16, %s18
        %s242 = smul.u32 16, %s18
        %v243 = vld [vmem:[%s228] sm:$0xff]
        %v244 = vld [vmem:[%s228 + $0x8] sm:$0xff]
        %v245 = vld [vmem:[%s228 + $0x10] sm:$0xff]
        %v246 = vld [vmem:[%s228 + $0x18] sm:$0xff]
        %v247 = vld [vmem:[%s228 + $0x20] sm:$0xff]
        %v248 = vld [vmem:[%s228 + $0x28] sm:$0xff]
        %v249 = vld [vmem:[%s228 + $0x30] sm:$0xff]
        %v250 = vld [vmem:[%s228 + $0x38] sm:$0xff]
        %v251 = vld [vmem:[%s228 + $0x40] sm:$0xff]
        %v252 = vld [vmem:[%s228 + $0x48] sm:$0xff]
        %v253 = vld [vmem:[%s228 + $0x50] sm:$0xff]
        %v254 = vld [vmem:[%s228 + $0x58] sm:$0xff]
        %v255 = vld [vmem:[%s228 + $0x60] sm:$0xff]
        %v256 = vld [vmem:[%s228 + $0x68] sm:$0xff]
        %v257 = vld [vmem:[%s228 + $0x70] sm:$0xff]
        %v258 = vld [vmem:[%s228 + $0x78] sm:$0xff]
        %v259 = vld [vmem:[%s234] sm:$0xff]
        %v260 = vld [vmem:[%s234 + $0x8] sm:$0xff]
        %v261 = vld [vmem:[%s234 + $0x10] sm:$0xff]
        %v262 = vld [vmem:[%s234 + $0x18] sm:$0xff]
        %v263 = vld [vmem:[%s234 + $0x20] sm:$0xff]
        %v264 = vld [vmem:[%s234 + $0x28] sm:$0xff]
        %v265 = vld [vmem:[%s234 + $0x30] sm:$0xff]
        %v266 = vld [vmem:[%s234 + $0x38] sm:$0xff]
        %v267 = vld [vmem:[%s234 + $0x40] sm:$0xff]
        %v268 = vld [vmem:[%s234 + $0x48] sm:$0xff]
        %v269 = vld [vmem:[%s234 + $0x50] sm:$0xff]
        %v270 = vld [vmem:[%s234 + $0x58] sm:$0xff]
        %v271 = vld [vmem:[%s234 + $0x60] sm:$0xff]
        %v272 = vld [vmem:[%s234 + $0x68] sm:$0xff]
        %v273 = vld [vmem:[%s234 + $0x70] sm:$0xff]
        %v274 = vld [vmem:[%s234 + $0x78] sm:$0xff]
        %v275 = vld [vmem:[%s240] sm:$0xff]
        %v276 = vld [vmem:[%s240 + $0x8] sm:$0xff]
        %v277 = vld [vmem:[%s240 + $0x10] sm:$0xff]
        %v278 = vld [vmem:[%s240 + $0x18] sm:$0xff]
        %v279 = vld [vmem:[%s240 + $0x20] sm:$0xff]
        %v280 = vld [vmem:[%s240 + $0x28] sm:$0xff]
        %v281 = vld [vmem:[%s240 + $0x30] sm:$0xff]
        %v282 = vld [vmem:[%s240 + $0x38] sm:$0xff]
        %v283 = vld [vmem:[%s240 + $0x40] sm:$0xff]
        %v284 = vld [vmem:[%s240 + $0x48] sm:$0xff]
        %v285 = vld [vmem:[%s240 + $0x50] sm:$0xff]
        %v286 = vld [vmem:[%s240 + $0x58] sm:$0xff]
        %v287 = vld [vmem:[%s240 + $0x60] sm:$0xff]
        %v288 = vld [vmem:[%s240 + $0x68] sm:$0xff]
        %v289 = vld [vmem:[%s240 + $0x70] sm:$0xff]
        %v290 = vld [vmem:[%s240 + $0x78] sm:$0xff]
        %v291 = vld [vmem:[%s3] sm:$0xff]
        %v292 = vld [vmem:[%s3 + $0x8] sm:$0xff]
        %v293 = vld [vmem:[%s3 + $0x10] sm:$0x1]
        %v294 = vld [vmem:[%s3 + $0x18] sm:$0xff]
        %v295 = vld [vmem:[%s3 + $0x20] sm:$0xff]
        %v296 = vld [vmem:[%s3 + $0x28] sm:$0xff]
        %v297 = vld [vmem:[%s3 + $0x30] sm:$0xff]
        %v298 = vld [vmem:[%s3 + $0x38] sm:$0xff]
        %v299 = vld [vmem:[%s3 + $0x40] sm:$0xff]
        %v300 = vld [vmem:[%s3 + $0x48] sm:$0xff]
        %v301 = vld [vmem:[%s3 + $0x50] sm:$0xff]
        %v302 = vld [vmem:[%s3 + $0x58] sm:$0x1]
        %v303 = vld [vmem:[%s3 + $0x60] sm:$0xff]
        %v304 = vld [vmem:[%s3 + $0x68] sm:$0xff]
        %v305 = vld [vmem:[%s3 + $0x70] sm:$0xff]
        %v306 = vld [vmem:[%s3 + $0x78] sm:$0xff]
        %v307 = vld [vmem:[%s3 + $0x80] sm:$0x1]
        %v308 = vld [vmem:[%s3 + $0x88] sm:$0xff]
        %v309 = vld [vmem:[%s3 + $0x90] sm:$0xff]
        %v310 = vld [vmem:[%s3 + $0x98] sm:$0xff]
        %v311 = vld [vmem:[%s3 + $0xa0] sm:$0xff]
        %v312 = vld [vmem:[%s3 + $0xa8] sm:$0x1]
        %313 = vmatprep.subr.mxu0 0.0
        %314 = vmatpush1.msra.mxu0 %v243
        %315 = vmatprep.subr.mxu0 0.0
        %316 = vmatpush1.msra.mxu0 %v244
        %317 = vmatprep.subr.mxu0 0.0
        %318 = vmatpush1.msra.mxu0 %v245
        %319 = vmatprep.subr.mxu0 0.0
        %320 = vmatpush1.msra.mxu0 %v246
        %321 = vmatprep.subr.mxu0 0.0
        %322 = vmatpush1.msra.mxu0 %v247
        %323 = vmatprep.subr.mxu0 0.0
        %324 = vmatpush1.msra.mxu0 %v248
        %325 = vmatprep.subr.mxu0 0.0
        %326 = vmatpush1.msra.mxu0 %v249
        %327 = vmatprep.subr.mxu0 0.0
        %328 = vmatpush1.msra.mxu0 %v250
        %329 = vmatprep.subr.mxu0 0.0
        %330 = vmatpush1.msra.mxu0 %v251
        %331 = vmatprep.subr.mxu0 0.0
        %332 = vmatpush1.msra.mxu0 %v252
        %333 = vmatprep.subr.mxu0 0.0
        %334 = vmatpush1.msra.mxu0 %v253
        %335 = vmatprep.subr.mxu0 0.0
        %336 = vmatpush1.msra.mxu0 %v254
        %337 = vmatprep.subr.mxu0 0.0
        %338 = vmatpush1.msra.mxu0 %v255
        %339 = vmatprep.subr.mxu0 0.0
        %340 = vmatpush1.msra.mxu0 %v256
        %341 = vmatprep.subr.mxu0 0.0
        %342 = vmatpush1.msra.mxu0 %v257
        %343 = vmatprep.subr.mxu0 0.0
        %344 = vmatpush1.msra.mxu0 %v258
        %345 = vmatprep.subr.mxu0 0.0
        %346 = vmatpush1.msra.mxu0 0.0
        %347 = vmatprep.subr.mxu0 0.0
        %348 = vmatpush1.msra.mxu0 0.0
        %349 = vmatprep.subr.mxu0 0.0
        %350 = vmatpush1.msra.mxu0 0.0
        %351 = vmatprep.subr.mxu0 0.0
        %352 = vmatpush1.msra.mxu0 0.0
        %353 = vmatprep.subr.mxu0 0.0
        %354 = vmatpush1.msra.mxu0 0.0
        %355 = vmatprep.subr.mxu0 0.0
        %356 = vmatpush1.msra.mxu0 0.0
        %357 = vmatprep.subr.mxu0 0.0
        %358 = vmatpush1.msra.mxu0 0.0
        %359 = vmatprep.subr.mxu0 0.0
        %360 = vmatpush1.msra.mxu0 0.0
        %361 = vmatprep.subr.mxu0 0.0
        %362 = vmatpush1.msra.mxu0 0.0
        %363 = vmatprep.subr.mxu0 0.0
        %364 = vmatpush1.msra.mxu0 0.0
        %365 = vmatprep.subr.mxu0 0.0
        %366 = vmatpush1.msra.mxu0 0.0
        %367 = vmatprep.subr.mxu0 0.0
        %368 = vmatpush1.msra.mxu0 0.0
        %369 = vmatprep.subr.mxu0 0.0
        %370 = vmatpush1.msra.mxu0 0.0
        %371 = vmatprep.subr.mxu0 0.0
        %372 = vmatpush1.msra.mxu0 0.0
        %373 = vmatprep.subr.mxu0 0.0
        %374 = vmatpush1.msra.mxu0 0.0
        %375 = vmatprep.subr.mxu0 0.0
        %376 = vmatpush1.msra.mxu0 0.0
        %377 = vmatprep.mubr.f32.mxu0 0.0
        %378 = vmatmul.mubr.f32.gmra.mrb[0].mxu0 %v259
        %v379 = vpop.f32.mrb[0].mxu0
        %v380 = vadd.f32 0.0, %v379
        %v381 = vpop.f32.mrb[0].mxu0
        %382 = vmatprep.mubr.f32.mxu0 0.0
        %383 = vmatmul.mubr.f32.gmra.mrb[0].mxu0 %v260
        %v384 = vpop.f32.mrb[0].mxu0
        %v385 = vadd.f32 0.0, %v384
        %v386 = vpop.f32.mrb[0].mxu0
        %387 = vmatprep.mubr.f32.mxu0 0.0
        %388 = vmatmul.mubr.f32.gmra.mrb[0].mxu0 %v261
        %v389 = vpop.f32.mrb[0].mxu0
        %v390 = vadd.f32 0.0, %v389
        %v391 = vpop.f32.mrb[0].mxu0
        %392 = vmatprep.mubr.f32.mxu0 0.0
        %393 = vmatmul.mubr.f32.gmra.mrb[0].mxu0 %v262
        %v394 = vpop.f32.mrb[0].mxu0
        %v395 = vadd.f32 0.0, %v394
        %v396 = vpop.f32.mrb[0].mxu0
        %397 = vmatprep.mubr.f32.mxu0 0.0
        %398 = vmatmul.mubr.f32.gmra.mrb[0].mxu0 %v263
        %v399 = vpop.f32.mrb[0].mxu0
        %v400 = vadd.f32 0.0, %v399
        %v401 = vpop.f32.mrb[0].mxu0
        %402 = vmatprep.mubr.f32.mxu0 0.0
        %403 = vmatmul.mubr.f32.gmra.mrb[0].mxu0 %v264
        %v404 = vpop.f32.mrb[0].mxu0
        %v405 = vadd.f32 0.0, %v404
        %v406 = vpop.f32.mrb[0].mxu0
        %407 = vmatprep.mubr.f32.mxu0 0.0
        %408 = vmatmul.mubr.f32.gmra.mrb[0].mxu0 %v265
        %v409 = vpop.f32.mrb[0].mxu0
        %v410 = vadd.f32 0.0, %v409
        %v411 = vpop.f32.mrb[0].mxu0
        %412 = vmatprep.mubr.f32.mxu0 0.0
        %413 = vmatmul.mubr.f32.gmra.mrb[0].mxu0 %v266
        %v414 = vpop.f32.mrb[0].mxu0
        %v415 = vadd.f32 0.0, %v414
        %v416 = vpop.f32.mrb[0].mxu0
        %417 = vmatprep.mubr.f32.mxu0 0.0
        %418 = vmatmul.mubr.f32.gmra.mrb[0].mxu0 %v267
        %v419 = vpop.f32.mrb[0].mxu0
        %v420 = vadd.f32 0.0, %v419
        %v421 = vpop.f32.mrb[0].mxu0
        %422 = vmatprep.mubr.f32.mxu0 0.0
        %423 = vmatmul.mubr.f32.gmra.mrb[0].mxu0 %v268
        %v424 = vpop.f32.mrb[0].mxu0
        %v425 = vadd.f32 0.0, %v424
        %v426 = vpop.f32.mrb[0].mxu0
        %427 = vmatprep.mubr.f32.mxu0 0.0
        %428 = vmatmul.mubr.f32.gmra.mrb[0].mxu0 %v269
        %v429 = vpop.f32.mrb[0].mxu0
        %v430 = vadd.f32 0.0, %v429
        %v431 = vpop.f32.mrb[0].mxu0
        %432 = vmatprep.mubr.f32.mxu0 0.0
        %433 = vmatmul.mubr.f32.gmra.mrb[0].mxu0 %v270
        %v434 = vpop.f32.mrb[0].mxu0
        %v435 = vadd.f32 0.0, %v434
        %v436 = vpop.f32.mrb[0].mxu0
        %437 = vmatprep.mubr.f32.mxu0 0.0
        %438 = vmatmul.mubr.f32.gmra.mrb[0].mxu0 %v271
        %v439 = vpop.f32.mrb[0].mxu0
        %v440 = vadd.f32 0.0, %v439
        %v441 = vpop.f32.mrb[0].mxu0
        %442 = vmatprep.mubr.f32.mxu0 0.0
        %443 = vmatmul.mubr.f32.gmra.mrb[0].mxu0 %v272
        %v444 = vpop.f32.mrb[0].mxu0
        %v445 = vadd.f32 0.0, %v444
        %v446 = vpop.f32.mrb[0].mxu0
        %447 = vmatprep.mubr.f32.mxu0 0.0
        %448 = vmatmul.mubr.f32.gmra.mrb[0].mxu0 %v273
        %v449 = vpop.f32.mrb[0].mxu0
        %v450 = vadd.f32 0.0, %v449
        %v451 = vpop.f32.mrb[0].mxu0
        %452 = vmatprep.mubr.f32.mxu0 0.0
        %453 = vmatmul.mubr.f32.gmra.mrb[0].mxu0 %v274
        %v454 = vpop.f32.mrb[0].mxu0
        %v455 = vadd.f32 0.0, %v454
        %v456 = vpop.f32.mrb[0].mxu0
        %457 = vdwg.mxu0
        %vm458 = vcmask 64512
        %v460 = vsel %vm458, %v380, 0
        %v463 = vsel %vm458, %v385, 0
        %v466 = vsel %vm458, %v390, 0
        %v469 = vsel %vm458, %v395, 0
        %v472 = vsel %vm458, %v400, 0
        %v475 = vsel %vm458, %v405, 0
        %v478 = vsel %vm458, %v410, 0
        %v481 = vsel %vm458, %v415, 0
        %v484 = vsel %vm458, %v420, 0
        %v487 = vsel %vm458, %v425, 0
        %v490 = vsel %vm458, %v430, 0
        %v493 = vsel %vm458, %v435, 0
        %v496 = vsel %vm458, %v440, 0
        %v499 = vsel %vm458, %v445, 0
        %v502 = vsel %vm458, %v450, 0
        %v505 = vsel %vm458, %v455, 0
        %507 = vmatprep.subr.mxu0 0.0
        %508 = vmatpush1.msra.mxu0 %v292
        %509 = vmatprep.subr.mxu0 0.0
        %510 = vmatpush1.msra.mxu0 0.0
        %511 = vmatprep.subr.mxu0 0.0
        %512 = vmatpush1.msra.mxu0 0.0
        %513 = vmatprep.subr.mxu0 0.0
        %514 = vmatpush1.msra.mxu0 0.0
        %515 = vmatprep.subr.mxu0 0.0
        %516 = vmatpush1.msra.mxu0 0.0
        %517 = vmatprep.subr.mxu0 0.0
        %518 = vmatpush1.msra.mxu0 0.0
        %519 = vmatprep.subr.mxu0 0.0
        %520 = vmatpush1.msra.mxu0 0.0
        %521 = vmatprep.subr.mxu0 0.0
        %522 = vmatpush1.msra.mxu0 0.0
        %523 = vmatprep.subr.mxu0 0.0
        %524 = vmatpush1.msra.mxu0 0.0
        %525 = vmatprep.subr.mxu0 0.0
        %526 = vmatpush1.msra.mxu0 0.0
        %527 = vmatprep.subr.mxu0 0.0
        %528 = vmatpush1.msra.mxu0 0.0
        %529 = vmatprep.subr.mxu0 0.0
        %530 = vmatpush1.msra.mxu0 0.0
        %531 = vmatprep.subr.mxu0 0.0
        %532 = vmatpush1.msra.mxu0 0.0
        %533 = vmatprep.subr.mxu0 0.0
        %534 = vmatpush1.msra.mxu0 0.0
        %535 = vmatprep.subr.mxu0 0.0
        %536 = vmatpush1.msra.mxu0 0.0
        %537 = vmatprep.subr.mxu0 0.0
        %538 = vmatpush1.msra.mxu0 0.0
        %539 = vmatprep.subr.mxu0 0.0
        %540 = vmatpush1.msra.mxu0 0.0
        %541 = vmatprep.subr.mxu0 0.0
        %542 = vmatpush1.msra.mxu0 0.0
        %543 = vmatprep.subr.mxu0 0.0
        %544 = vmatpush1.msra.mxu0 0.0
        %545 = vmatprep.subr.mxu0 0.0
        %546 = vmatpush1.msra.mxu0 0.0
        %547 = vmatprep.subr.mxu0 0.0
        %548 = vmatpush1.msra.mxu0 0.0
        %549 = vmatprep.subr.mxu0 0.0
        %550 = vmatpush1.msra.mxu0 0.0
        %551 = vmatprep.subr.mxu0 0.0
        %552 = vmatpush1.msra.mxu0 0.0
        %553 = vmatprep.subr.mxu0 0.0
        %554 = vmatpush1.msra.mxu0 0.0
        %555 = vmatprep.subr.mxu0 0.0
        %556 = vmatpush1.msra.mxu0 0.0
        %557 = vmatprep.subr.mxu0 0.0
        %558 = vmatpush1.msra.mxu0 0.0
        %559 = vmatprep.subr.mxu0 0.0
        %560 = vmatpush1.msra.mxu0 0.0
        %561 = vmatprep.subr.mxu0 0.0
        %562 = vmatpush1.msra.mxu0 0.0
        %563 = vmatprep.subr.mxu0 0.0
        %564 = vmatpush1.msra.mxu0 0.0
        %565 = vmatprep.subr.mxu0 0.0
        %566 = vmatpush1.msra.mxu0 0.0
        %567 = vmatprep.subr.mxu0 0.0
        %568 = vmatpush1.msra.mxu0 0.0
        %569 = vmatprep.subr.mxu0 0.0
        %570 = vmatpush1.msra.mxu0 0.0
        %571 = vmatprep.mubr.f32.mxu0 0.0
        %572 = vmatmul.mubr.f32.gmra.mrb[0].mxu0 %v460
        %v573 = vpop.f32.mrb[0].mxu0
        %v574 = vadd.f32 0.0, %v573
        %v575 = vpop.f32.mrb[0].mxu0
        %576 = vmatprep.mubr.f32.mxu0 0.0
        %577 = vmatmul.mubr.f32.gmra.mrb[0].mxu0 %v463
        %v578 = vpop.f32.mrb[0].mxu0
        %v579 = vadd.f32 0.0, %v578
        %v580 = vpop.f32.mrb[0].mxu0
        %581 = vmatprep.mubr.f32.mxu0 0.0
        %582 = vmatmul.mubr.f32.gmra.mrb[0].mxu0 %v466
        %v583 = vpop.f32.mrb[0].mxu0
        %v584 = vadd.f32 0.0, %v583
        %v585 = vpop.f32.mrb[0].mxu0
        %586 = vmatprep.mubr.f32.mxu0 0.0
        %587 = vmatmul.mubr.f32.gmra.mrb[0].mxu0 %v469
        %v588 = vpop.f32.mrb[0].mxu0
        %v589 = vadd.f32 0.0, %v588
        %v590 = vpop.f32.mrb[0].mxu0
        %591 = vmatprep.mubr.f32.mxu0 0.0
        %592 = vmatmul.mubr.f32.gmra.mrb[0].mxu0 %v472
        %v593 = vpop.f32.mrb[0].mxu0
        %v594 = vadd.f32 0.0, %v593
        %v595 = vpop.f32.mrb[0].mxu0
        %596 = vmatprep.mubr.f32.mxu0 0.0
        %597 = vmatmul.mubr.f32.gmra.mrb[0].mxu0 %v475
        %v598 = vpop.f32.mrb[0].mxu0
        %v599 = vadd.f32 0.0, %v598
        %v600 = vpop.f32.mrb[0].mxu0
        %601 = vmatprep.mubr.f32.mxu0 0.0
        %602 = vmatmul.mubr.f32.gmra.mrb[0].mxu0 %v478
        %v603 = vpop.f32.mrb[0].mxu0
        %v604 = vadd.f32 0.0, %v603
        %v605 = vpop.f32.mrb[0].mxu0
        %606 = vmatprep.mubr.f32.mxu0 0.0
        %607 = vmatmul.mubr.f32.gmra.mrb[0].mxu0 %v481
        %v608 = vpop.f32.mrb[0].mxu0
        %v609 = vadd.f32 0.0, %v608
        %v610 = vpop.f32.mrb[0].mxu0
        %611 = vmatprep.mubr.f32.mxu0 0.0
        %612 = vmatmul.mubr.f32.gmra.mrb[0].mxu0 %v484
        %v613 = vpop.f32.mrb[0].mxu0
        %v614 = vadd.f32 0.0, %v613
        %v615 = vpop.f32.mrb[0].mxu0
        %616 = vmatprep.mubr.f32.mxu0 0.0
        %617 = vmatmul.mubr.f32.gmra.mrb[0].mxu0 %v487
        %v618 = vpop.f32.mrb[0].mxu0
        %v619 = vadd.f32 0.0, %v618
        %v620 = vpop.f32.mrb[0].mxu0
        %621 = vmatprep.mubr.f32.mxu0 0.0
        %622 = vmatmul.mubr.f32.gmra.mrb[0].mxu0 %v490
        %v623 = vpop.f32.mrb[0].mxu0
        %v624 = vadd.f32 0.0, %v623
        %v625 = vpop.f32.mrb[0].mxu0
        %626 = vmatprep.mubr.f32.mxu0 0.0
        %627 = vmatmul.mubr.f32.gmra.mrb[0].mxu0 %v493
        %v628 = vpop.f32.mrb[0].mxu0
        %v629 = vadd.f32 0.0, %v628
        %v630 = vpop.f32.mrb[0].mxu0
        %631 = vmatprep.mubr.f32.mxu0 0.0
        %632 = vmatmul.mubr.f32.gmra.mrb[0].mxu0 %v496
        %v633 = vpop.f32.mrb[0].mxu0
        %v634 = vadd.f32 0.0, %v633
        %v635 = vpop.f32.mrb[0].mxu0
        %636 = vmatprep.mubr.f32.mxu0 0.0
        %637 = vmatmul.mubr.f32.gmra.mrb[0].mxu0 %v499
        %v638 = vpop.f32.mrb[0].mxu0
        %v639 = vadd.f32 0.0, %v638
        %v640 = vpop.f32.mrb[0].mxu0
        %641 = vmatprep.mubr.f32.mxu0 0.0
        %642 = vmatmul.mubr.f32.gmra.mrb[0].mxu0 %v502
        %v643 = vpop.f32.mrb[0].mxu0
        %v644 = vadd.f32 0.0, %v643
        %v645 = vpop.f32.mrb[0].mxu0
        %646 = vmatprep.mubr.f32.mxu0 0.0
        %647 = vmatmul.mubr.f32.gmra.mrb[0].mxu0 %v505
        %v648 = vpop.f32.mrb[0].mxu0
        %v649 = vadd.f32 0.0, %v648
        %v650 = vpop.f32.mrb[0].mxu0
        %651 = vdwg.mxu0
        %v653 = vsel %vm458, %v243, 0
        %v656 = vsel %vm458, %v244, 0
        %v659 = vsel %vm458, %v245, 0
        %v662 = vsel %vm458, %v246, 0
        %v665 = vsel %vm458, %v247, 0
        %v668 = vsel %vm458, %v248, 0
        %v671 = vsel %vm458, %v249, 0
        %v674 = vsel %vm458, %v250, 0
        %v677 = vsel %vm458, %v251, 0
        %v680 = vsel %vm458, %v252, 0
        %v683 = vsel %vm458, %v253, 0
        %v686 = vsel %vm458, %v254, 0
        %v689 = vsel %vm458, %v255, 0
        %v692 = vsel %vm458, %v256, 0
        %v695 = vsel %vm458, %v257, 0
        %v698 = vsel %vm458, %v258, 0
        %700 = vmatprep.subr.mxu0 0.0
        %701 = vmatpush1.msra.mxu0 %v291
        %702 = vmatprep.subr.mxu0 0.0
        %703 = vmatpush1.msra.mxu0 0.0
        %704 = vmatprep.subr.mxu0 0.0
        %705 = vmatpush1.msra.mxu0 0.0
        %706 = vmatprep.subr.mxu0 0.0
        %707 = vmatpush1.msra.mxu0 0.0
        %708 = vmatprep.subr.mxu0 0.0
        %709 = vmatpush1.msra.mxu0 0.0
        %710 = vmatprep.subr.mxu0 0.0
        %711 = vmatpush1.msra.mxu0 0.0
        %712 = vmatprep.subr.mxu0 0.0
        %713 = vmatpush1.msra.mxu0 0.0
        %714 = vmatprep.subr.mxu0 0.0
        %715 = vmatpush1.msra.mxu0 0.0
        %716 = vmatprep.subr.mxu0 0.0
        %717 = vmatpush1.msra.mxu0 0.0
        %718 = vmatprep.subr.mxu0 0.0
        %719 = vmatpush1.msra.mxu0 0.0
        %720 = vmatprep.subr.mxu0 0.0
        %721 = vmatpush1.msra.mxu0 0.0
        %722 = vmatprep.subr.mxu0 0.0
        %723 = vmatpush1.msra.mxu0 0.0
        %724 = vmatprep.subr.mxu0 0.0
        %725 = vmatpush1.msra.mxu0 0.0
        %726 = vmatprep.subr.mxu0 0.0
        %727 = vmatpush1.msra.mxu0 0.0
        %728 = vmatprep.subr.mxu0 0.0
        %729 = vmatpush1.msra.mxu0 0.0
        %730 = vmatprep.subr.mxu0 0.0
        %731 = vmatpush1.msra.mxu0 0.0
        %732 = vmatprep.subr.mxu0 0.0
        %733 = vmatpush1.msra.mxu0 0.0
        %734 = vmatprep.subr.mxu0 0.0
        %735 = vmatpush1.msra.mxu0 0.0
        %736 = vmatprep.subr.mxu0 0.0
        %737 = vmatpush1.msra.mxu0 0.0
        %738 = vmatprep.subr.mxu0 0.0
        %739 = vmatpush1.msra.mxu0 0.0
        %740 = vmatprep.subr.mxu0 0.0
        %741 = vmatpush1.msra.mxu0 0.0
        %742 = vmatprep.subr.mxu0 0.0
        %743 = vmatpush1.msra.mxu0 0.0
        %744 = vmatprep.subr.mxu0 0.0
        %745 = vmatpush1.msra.mxu0 0.0
        %746 = vmatprep.subr.mxu0 0.0
        %747 = vmatpush1.msra.mxu0 0.0
        %748 = vmatprep.subr.mxu0 0.0
        %749 = vmatpush1.msra.mxu0 0.0
        %750 = vmatprep.subr.mxu0 0.0
        %751 = vmatpush1.msra.mxu0 0.0
        %752 = vmatprep.subr.mxu0 0.0
        %753 = vmatpush1.msra.mxu0 0.0
        %754 = vmatprep.subr.mxu0 0.0
        %755 = vmatpush1.msra.mxu0 0.0
        %756 = vmatprep.subr.mxu0 0.0
        %757 = vmatpush1.msra.mxu0 0.0
        %758 = vmatprep.subr.mxu0 0.0
        %759 = vmatpush1.msra.mxu0 0.0
        %760 = vmatprep.subr.mxu0 0.0
        %761 = vmatpush1.msra.mxu0 0.0
        %762 = vmatprep.subr.mxu0 0.0
        %763 = vmatpush1.msra.mxu0 0.0
        %764 = vmatprep.mubr.f32.mxu0 0.0
        %765 = vmatmul.mubr.f32.gmra.mrb[0].mxu0 %v653
        %v766 = vpop.f32.mrb[0].mxu0
        %v767 = vadd.f32 %v574, %v766
        %v768 = vpop.f32.mrb[0].mxu0
        %769 = vmatprep.mubr.f32.mxu0 0.0
        %770 = vmatmul.mubr.f32.gmra.mrb[0].mxu0 %v656
        %v771 = vpop.f32.mrb[0].mxu0
        %v772 = vadd.f32 %v579, %v771
        %v773 = vpop.f32.mrb[0].mxu0
        %774 = vmatprep.mubr.f32.mxu0 0.0
        %775 = vmatmul.mubr.f32.gmra.mrb[0].mxu0 %v659
        %v776 = vpop.f32.mrb[0].mxu0
        %v777 = vadd.f32 %v584, %v776
        %v778 = vpop.f32.mrb[0].mxu0
        %779 = vmatprep.mubr.f32.mxu0 0.0
        %780 = vmatmul.mubr.f32.gmra.mrb[0].mxu0 %v662
        %v781 = vpop.f32.mrb[0].mxu0
        %v782 = vadd.f32 %v589, %v781
        %v783 = vpop.f32.mrb[0].mxu0
        %784 = vmatprep.mubr.f32.mxu0 0.0
        %785 = vmatmul.mubr.f32.gmra.mrb[0].mxu0 %v665
        %v786 = vpop.f32.mrb[0].mxu0
        %v787 = vadd.f32 %v594, %v786
        %v788 = vpop.f32.mrb[0].mxu0
        %789 = vmatprep.mubr.f32.mxu0 0.0
        %790 = vmatmul.mubr.f32.gmra.mrb[0].mxu0 %v668
        %v791 = vpop.f32.mrb[0].mxu0
        %v792 = vadd.f32 %v599, %v791
        %v793 = vpop.f32.mrb[0].mxu0
        %794 = vmatprep.mubr.f32.mxu0 0.0
        %795 = vmatmul.mubr.f32.gmra.mrb[0].mxu0 %v671
        %v796 = vpop.f32.mrb[0].mxu0
        %v797 = vadd.f32 %v604, %v796
        %v798 = vpop.f32.mrb[0].mxu0
        %799 = vmatprep.mubr.f32.mxu0 0.0
        %800 = vmatmul.mubr.f32.gmra.mrb[0].mxu0 %v674
        %v801 = vpop.f32.mrb[0].mxu0
        %v802 = vadd.f32 %v609, %v801
        %v803 = vpop.f32.mrb[0].mxu0
        %804 = vmatprep.mubr.f32.mxu0 0.0
        %805 = vmatmul.mubr.f32.gmra.mrb[0].mxu0 %v677
        %v806 = vpop.f32.mrb[0].mxu0
        %v807 = vadd.f32 %v614, %v806
        %v808 = vpop.f32.mrb[0].mxu0
        %809 = vmatprep.mubr.f32.mxu0 0.0
        %810 = vmatmul.mubr.f32.gmra.mrb[0].mxu0 %v680
        %v811 = vpop.f32.mrb[0].mxu0
        %v812 = vadd.f32 %v619, %v811
        %v813 = vpop.f32.mrb[0].mxu0
        %814 = vmatprep.mubr.f32.mxu0 0.0
        %815 = vmatmul.mubr.f32.gmra.mrb[0].mxu0 %v683
        %v816 = vpop.f32.mrb[0].mxu0
        %v817 = vadd.f32 %v624, %v816
        %v818 = vpop.f32.mrb[0].mxu0
        %819 = vmatprep.mubr.f32.mxu0 0.0
        %820 = vmatmul.mubr.f32.gmra.mrb[0].mxu0 %v686
        %v821 = vpop.f32.mrb[0].mxu0
        %v822 = vadd.f32 %v629, %v821
        %v823 = vpop.f32.mrb[0].mxu0
        %824 = vmatprep.mubr.f32.mxu0 0.0
        %825 = vmatmul.mubr.f32.gmra.mrb[0].mxu0 %v689
        %v826 = vpop.f32.mrb[0].mxu0
        %v827 = vadd.f32 %v634, %v826
        %v828 = vpop.f32.mrb[0].mxu0
        %829 = vmatprep.mubr.f32.mxu0 0.0
        %830 = vmatmul.mubr.f32.gmra.mrb[0].mxu0 %v692
        %v831 = vpop.f32.mrb[0].mxu0
        %v832 = vadd.f32 %v639, %v831
        %v833 = vpop.f32.mrb[0].mxu0
        %834 = vmatprep.mubr.f32.mxu0 0.0
        %835 = vmatmul.mubr.f32.gmra.mrb[0].mxu0 %v695
        %v836 = vpop.f32.mrb[0].mxu0
        %v837 = vadd.f32 %v644, %v836
        %v838 = vpop.f32.mrb[0].mxu0
        %839 = vmatprep.mubr.f32.mxu0 0.0
        %840 = vmatmul.mubr.f32.gmra.mrb[0].mxu0 %v698
        %v841 = vpop.f32.mrb[0].mxu0
        %v842 = vadd.f32 %v649, %v841
        %v843 = vpop.f32.mrb[0].mxu0
        %844 = vdwg.mxu0
        %v845 = vlaneseq
        %v846 = vshrl.u32 %v845, 7
        %v847 = vsub.s32 0, %v846
        %v848 = vrot.slane %v293, %v847
        %v849 = vadd.f32 %v767, %v848
        %v850 = vadd.f32 %v772, %v848
        %v851 = vadd.f32 %v777, %v848
        %v852 = vadd.f32 %v782, %v848
        %v853 = vadd.f32 %v787, %v848
        %v854 = vadd.f32 %v792, %v848
        %v855 = vadd.f32 %v797, %v848
        %v856 = vadd.f32 %v802, %v848
        %v857 = vadd.f32 %v807, %v848
        %v858 = vadd.f32 %v812, %v848
        %v859 = vadd.f32 %v817, %v848
        %v860 = vadd.f32 %v822, %v848
        %v861 = vadd.f32 %v827, %v848
        %v862 = vadd.f32 %v832, %v848
        %v863 = vadd.f32 %v837, %v848
        %v864 = vadd.f32 %v842, %v848
        %v865 = vmax.f32 %v849, 0.0
        %v866 = vmax.f32 %v850, 0.0
        %v867 = vmax.f32 %v851, 0.0
        %v868 = vmax.f32 %v852, 0.0
        %v869 = vmax.f32 %v853, 0.0
        %v870 = vmax.f32 %v854, 0.0
        %v871 = vmax.f32 %v855, 0.0
        %v872 = vmax.f32 %v856, 0.0
        %v873 = vmax.f32 %v857, 0.0
        %v874 = vmax.f32 %v858, 0.0
        %v875 = vmax.f32 %v859, 0.0
        %v876 = vmax.f32 %v860, 0.0
        %v877 = vmax.f32 %v861, 0.0
        %v878 = vmax.f32 %v862, 0.0
        %v879 = vmax.f32 %v863, 0.0
        %v880 = vmax.f32 %v864, 0.0
        %881 = vmatprep.subr.mxu0 0.0
        %882 = vmatpush1.msra.mxu0 %v865
        %883 = vmatprep.subr.mxu0 0.0
        %884 = vmatpush1.msra.mxu0 %v866
        %885 = vmatprep.subr.mxu0 0.0
        %886 = vmatpush1.msra.mxu0 %v867
        %887 = vmatprep.subr.mxu0 0.0
        %888 = vmatpush1.msra.mxu0 %v868
        %889 = vmatprep.subr.mxu0 0.0
        %890 = vmatpush1.msra.mxu0 %v869
        %891 = vmatprep.subr.mxu0 0.0
        %892 = vmatpush1.msra.mxu0 %v870
        %893 = vmatprep.subr.mxu0 0.0
        %894 = vmatpush1.msra.mxu0 %v871
        %895 = vmatprep.subr.mxu0 0.0
        %896 = vmatpush1.msra.mxu0 %v872
        %897 = vmatprep.subr.mxu0 0.0
        %898 = vmatpush1.msra.mxu0 %v873
        %899 = vmatprep.subr.mxu0 0.0
        %900 = vmatpush1.msra.mxu0 %v874
        %901 = vmatprep.subr.mxu0 0.0
        %902 = vmatpush1.msra.mxu0 %v875
        %903 = vmatprep.subr.mxu0 0.0
        %904 = vmatpush1.msra.mxu0 %v876
        %905 = vmatprep.subr.mxu0 0.0
        %906 = vmatpush1.msra.mxu0 %v877
        %907 = vmatprep.subr.mxu0 0.0
        %908 = vmatpush1.msra.mxu0 %v878
        %909 = vmatprep.subr.mxu0 0.0
        %910 = vmatpush1.msra.mxu0 %v879
        %911 = vmatprep.subr.mxu0 0.0
        %912 = vmatpush1.msra.mxu0 %v880
        %913 = vmatprep.subr.mxu0 0.0
        %914 = vmatpush1.msra.mxu0 0.0
        %915 = vmatprep.subr.mxu0 0.0
        %916 = vmatpush1.msra.mxu0 0.0
        %917 = vmatprep.subr.mxu0 0.0
        %918 = vmatpush1.msra.mxu0 0.0
        %919 = vmatprep.subr.mxu0 0.0
        %920 = vmatpush1.msra.mxu0 0.0
        %921 = vmatprep.subr.mxu0 0.0
        %922 = vmatpush1.msra.mxu0 0.0
        %923 = vmatprep.subr.mxu0 0.0
        %924 = vmatpush1.msra.mxu0 0.0
        %925 = vmatprep.subr.mxu0 0.0
        %926 = vmatpush1.msra.mxu0 0.0
        %927 = vmatprep.subr.mxu0 0.0
        %928 = vmatpush1.msra.mxu0 0.0
        %929 = vmatprep.subr.mxu0 0.0
        %930 = vmatpush1.msra.mxu0 0.0
        %931 = vmatprep.subr.mxu0 0.0
        %932 = vmatpush1.msra.mxu0 0.0
        %933 = vmatprep.subr.mxu0 0.0
        %934 = vmatpush1.msra.mxu0 0.0
        %935 = vmatprep.subr.mxu0 0.0
        %936 = vmatpush1.msra.mxu0 0.0
        %937 = vmatprep.subr.mxu0 0.0
        %938 = vmatpush1.msra.mxu0 0.0
        %939 = vmatprep.subr.mxu0 0.0
        %940 = vmatpush1.msra.mxu0 0.0
        %941 = vmatprep.subr.mxu0 0.0
        %942 = vmatpush1.msra.mxu0 0.0
        %943 = vmatprep.subr.mxu0 0.0
        %944 = vmatpush1.msra.mxu0 0.0
        %945 = vmatprep.mubr.f32.mxu0 0.0
        %946 = vmatmul.mubr.f32.gmra.mrb[0].mxu0 %v259
        %v947 = vpop.f32.mrb[0].mxu0
        %v948 = vadd.f32 0.0, %v947
        %v949 = vpop.f32.mrb[0].mxu0
        %950 = vmatprep.mubr.f32.mxu0 0.0
        %951 = vmatmul.mubr.f32.gmra.mrb[0].mxu0 %v260
        %v952 = vpop.f32.mrb[0].mxu0
        %v953 = vadd.f32 0.0, %v952
        %v954 = vpop.f32.mrb[0].mxu0
        %955 = vmatprep.mubr.f32.mxu0 0.0
        %956 = vmatmul.mubr.f32.gmra.mrb[0].mxu0 %v261
        %v957 = vpop.f32.mrb[0].mxu0
        %v958 = vadd.f32 0.0, %v957
        %v959 = vpop.f32.mrb[0].mxu0
        %960 = vmatprep.mubr.f32.mxu0 0.0
        %961 = vmatmul.mubr.f32.gmra.mrb[0].mxu0 %v262
        %v962 = vpop.f32.mrb[0].mxu0
        %v963 = vadd.f32 0.0, %v962
        %v964 = vpop.f32.mrb[0].mxu0
        %965 = vmatprep.mubr.f32.mxu0 0.0
        %966 = vmatmul.mubr.f32.gmra.mrb[0].mxu0 %v263
        %v967 = vpop.f32.mrb[0].mxu0
        %v968 = vadd.f32 0.0, %v967
        %v969 = vpop.f32.mrb[0].mxu0
        %970 = vmatprep.mubr.f32.mxu0 0.0
        %971 = vmatmul.mubr.f32.gmra.mrb[0].mxu0 %v264
        %v972 = vpop.f32.mrb[0].mxu0
        %v973 = vadd.f32 0.0, %v972
        %v974 = vpop.f32.mrb[0].mxu0
        %975 = vmatprep.mubr.f32.mxu0 0.0
        %976 = vmatmul.mubr.f32.gmra.mrb[0].mxu0 %v265
        %v977 = vpop.f32.mrb[0].mxu0
        %v978 = vadd.f32 0.0, %v977
        %v979 = vpop.f32.mrb[0].mxu0
        %980 = vmatprep.mubr.f32.mxu0 0.0
        %981 = vmatmul.mubr.f32.gmra.mrb[0].mxu0 %v266
        %v982 = vpop.f32.mrb[0].mxu0
        %v983 = vadd.f32 0.0, %v982
        %v984 = vpop.f32.mrb[0].mxu0
        %985 = vmatprep.mubr.f32.mxu0 0.0
        %986 = vmatmul.mubr.f32.gmra.mrb[0].mxu0 %v267
        %v987 = vpop.f32.mrb[0].mxu0
        %v988 = vadd.f32 0.0, %v987
        %v989 = vpop.f32.mrb[0].mxu0
        %990 = vmatprep.mubr.f32.mxu0 0.0
        %991 = vmatmul.mubr.f32.gmra.mrb[0].mxu0 %v268
        %v992 = vpop.f32.mrb[0].mxu0
        %v993 = vadd.f32 0.0, %v992
        %v994 = vpop.f32.mrb[0].mxu0
        %995 = vmatprep.mubr.f32.mxu0 0.0
        %996 = vmatmul.mubr.f32.gmra.mrb[0].mxu0 %v269
        %v997 = vpop.f32.mrb[0].mxu0
        %v998 = vadd.f32 0.0, %v997
        %v999 = vpop.f32.mrb[0].mxu0
        %1000 = vmatprep.mubr.f32.mxu0 0.0
        %1001 = vmatmul.mubr.f32.gmra.mrb[0].mxu0 %v270
        %v1002 = vpop.f32.mrb[0].mxu0
        %v1003 = vadd.f32 0.0, %v1002
        %v1004 = vpop.f32.mrb[0].mxu0
        %1005 = vmatprep.mubr.f32.mxu0 0.0
        %1006 = vmatmul.mubr.f32.gmra.mrb[0].mxu0 %v271
        %v1007 = vpop.f32.mrb[0].mxu0
        %v1008 = vadd.f32 0.0, %v1007
        %v1009 = vpop.f32.mrb[0].mxu0
        %1010 = vmatprep.mubr.f32.mxu0 0.0
        %1011 = vmatmul.mubr.f32.gmra.mrb[0].mxu0 %v272
        %v1012 = vpop.f32.mrb[0].mxu0
        %v1013 = vadd.f32 0.0, %v1012
        %v1014 = vpop.f32.mrb[0].mxu0
        %1015 = vmatprep.mubr.f32.mxu0 0.0
        %1016 = vmatmul.mubr.f32.gmra.mrb[0].mxu0 %v273
        %v1017 = vpop.f32.mrb[0].mxu0
        %v1018 = vadd.f32 0.0, %v1017
        %v1019 = vpop.f32.mrb[0].mxu0
        %1020 = vmatprep.mubr.f32.mxu0 0.0
        %1021 = vmatmul.mubr.f32.gmra.mrb[0].mxu0 %v274
        %v1022 = vpop.f32.mrb[0].mxu0
        %v1023 = vadd.f32 0.0, %v1022
        %v1024 = vpop.f32.mrb[0].mxu0
        %1025 = vdwg.mxu0
        %vm1026 = vcmask 261120
        %v1028 = vsel %vm1026, %v948, 0
        %v1031 = vsel %vm1026, %v953, 0
        %v1034 = vsel %vm1026, %v958, 0
        %v1037 = vsel %vm1026, %v963, 0
        %v1040 = vsel %vm1026, %v968, 0
        %v1043 = vsel %vm1026, %v973, 0
        %v1046 = vsel %vm1026, %v978, 0
        %v1049 = vsel %vm1026, %v983, 0
        %v1052 = vsel %vm1026, %v988, 0
        %v1055 = vsel %vm1026, %v993, 0
        %v1058 = vsel %vm1026, %v998, 0
        %v1061 = vsel %vm1026, %v1003, 0
        %v1064 = vsel %vm1026, %v1008, 0
        %v1067 = vsel %vm1026, %v1013, 0
        %v1070 = vsel %vm1026, %v1018, 0
        %v1073 = vsel %vm1026, %v1023, 0
        %1075 = vmatprep.subr.mxu0 0.0
        %1076 = vmatpush1.msra.mxu0 %v298
        %1077 = vmatprep.subr.mxu0 0.0
        %1078 = vmatpush1.msra.mxu0 %v299
        %1079 = vmatprep.subr.mxu0 0.0
        %1080 = vmatpush1.msra.mxu0 %v300
        %1081 = vmatprep.subr.mxu0 0.0
        %1082 = vmatpush1.msra.mxu0 %v301
        %1083 = vmatprep.subr.mxu0 0.0
        %1084 = vmatpush1.msra.mxu0 0.0
        %1085 = vmatprep.subr.mxu0 0.0
        %1086 = vmatpush1.msra.mxu0 0.0
        %1087 = vmatprep.subr.mxu0 0.0
        %1088 = vmatpush1.msra.mxu0 0.0
        %1089 = vmatprep.subr.mxu0 0.0
        %1090 = vmatpush1.msra.mxu0 0.0
        %1091 = vmatprep.subr.mxu0 0.0
        %1092 = vmatpush1.msra.mxu0 0.0
        %1093 = vmatprep.subr.mxu0 0.0
        %1094 = vmatpush1.msra.mxu0 0.0
        %1095 = vmatprep.subr.mxu0 0.0
        %1096 = vmatpush1.msra.mxu0 0.0
        %1097 = vmatprep.subr.mxu0 0.0
        %1098 = vmatpush1.msra.mxu0 0.0
        %1099 = vmatprep.subr.mxu0 0.0
        %1100 = vmatpush1.msra.mxu0 0.0
        %1101 = vmatprep.subr.mxu0 0.0
        %1102 = vmatpush1.msra.mxu0 0.0
        %1103 = vmatprep.subr.mxu0 0.0
        %1104 = vmatpush1.msra.mxu0 0.0
        %1105 = vmatprep.subr.mxu0 0.0
        %1106 = vmatpush1.msra.mxu0 0.0
        %1107 = vmatprep.subr.mxu0 0.0
        %1108 = vmatpush1.msra.mxu0 0.0
        %1109 = vmatprep.subr.mxu0 0.0
        %1110 = vmatpush1.msra.mxu0 0.0
        %1111 = vmatprep.subr.mxu0 0.0
        %1112 = vmatpush1.msra.mxu0 0.0
        %1113 = vmatprep.subr.mxu0 0.0
        %1114 = vmatpush1.msra.mxu0 0.0
        %1115 = vmatprep.subr.mxu0 0.0
        %1116 = vmatpush1.msra.mxu0 0.0
        %1117 = vmatprep.subr.mxu0 0.0
        %1118 = vmatpush1.msra.mxu0 0.0
        %1119 = vmatprep.subr.mxu0 0.0
        %1120 = vmatpush1.msra.mxu0 0.0
        %1121 = vmatprep.subr.mxu0 0.0
        %1122 = vmatpush1.msra.mxu0 0.0
        %1123 = vmatprep.subr.mxu0 0.0
        %1124 = vmatpush1.msra.mxu0 0.0
        %1125 = vmatprep.subr.mxu0 0.0
        %1126 = vmatpush1.msra.mxu0 0.0
        %1127 = vmatprep.subr.mxu0 0.0
        %1128 = vmatpush1.msra.mxu0 0.0
        %1129 = vmatprep.subr.mxu0 0.0
        %1130 = vmatpush1.msra.mxu0 0.0
        %1131 = vmatprep.subr.mxu0 0.0
        %1132 = vmatpush1.msra.mxu0 0.0
        %1133 = vmatprep.subr.mxu0 0.0
        %1134 = vmatpush1.msra.mxu0 0.0
        %1135 = vmatprep.subr.mxu0 0.0
        %1136 = vmatpush1.msra.mxu0 0.0
        %1137 = vmatprep.subr.mxu0 0.0
        %1138 = vmatpush1.msra.mxu0 0.0
        %1139 = vmatprep.mubr.f32.mxu0 0.0
        %1140 = vmatmul.mubr.f32.gmra.mrb[0].mxu0 %v1028
        %v1141 = vpop.f32.mrb[0].mxu0
        %v1142 = vadd.f32 0.0, %v1141
        %v1143 = vpop.f32.mrb[0].mxu0
        %1144 = vmatprep.mubr.f32.mxu0 0.0
        %1145 = vmatmul.mubr.f32.gmra.mrb[0].mxu0 %v1031
        %v1146 = vpop.f32.mrb[0].mxu0
        %v1147 = vadd.f32 0.0, %v1146
        %v1148 = vpop.f32.mrb[0].mxu0
        %1149 = vmatprep.mubr.f32.mxu0 0.0
        %1150 = vmatmul.mubr.f32.gmra.mrb[0].mxu0 %v1034
        %v1151 = vpop.f32.mrb[0].mxu0
        %v1152 = vadd.f32 0.0, %v1151
        %v1153 = vpop.f32.mrb[0].mxu0
        %1154 = vmatprep.mubr.f32.mxu0 0.0
        %1155 = vmatmul.mubr.f32.gmra.mrb[0].mxu0 %v1037
        %v1156 = vpop.f32.mrb[0].mxu0
        %v1157 = vadd.f32 0.0, %v1156
        %v1158 = vpop.f32.mrb[0].mxu0
        %1159 = vmatprep.mubr.f32.mxu0 0.0
        %1160 = vmatmul.mubr.f32.gmra.mrb[0].mxu0 %v1040
        %v1161 = vpop.f32.mrb[0].mxu0
        %v1162 = vadd.f32 0.0, %v1161
        %v1163 = vpop.f32.mrb[0].mxu0
        %1164 = vmatprep.mubr.f32.mxu0 0.0
        %1165 = vmatmul.mubr.f32.gmra.mrb[0].mxu0 %v1043
        %v1166 = vpop.f32.mrb[0].mxu0
        %v1167 = vadd.f32 0.0, %v1166
        %v1168 = vpop.f32.mrb[0].mxu0
        %1169 = vmatprep.mubr.f32.mxu0 0.0
        %1170 = vmatmul.mubr.f32.gmra.mrb[0].mxu0 %v1046
        %v1171 = vpop.f32.mrb[0].mxu0
        %v1172 = vadd.f32 0.0, %v1171
        %v1173 = vpop.f32.mrb[0].mxu0
        %1174 = vmatprep.mubr.f32.mxu0 0.0
        %1175 = vmatmul.mubr.f32.gmra.mrb[0].mxu0 %v1049
        %v1176 = vpop.f32.mrb[0].mxu0
        %v1177 = vadd.f32 0.0, %v1176
        %v1178 = vpop.f32.mrb[0].mxu0
        %1179 = vmatprep.mubr.f32.mxu0 0.0
        %1180 = vmatmul.mubr.f32.gmra.mrb[0].mxu0 %v1052
        %v1181 = vpop.f32.mrb[0].mxu0
        %v1182 = vadd.f32 0.0, %v1181
        %v1183 = vpop.f32.mrb[0].mxu0
        %1184 = vmatprep.mubr.f32.mxu0 0.0
        %1185 = vmatmul.mubr.f32.gmra.mrb[0].mxu0 %v1055
        %v1186 = vpop.f32.mrb[0].mxu0
        %v1187 = vadd.f32 0.0, %v1186
        %v1188 = vpop.f32.mrb[0].mxu0
        %1189 = vmatprep.mubr.f32.mxu0 0.0
        %1190 = vmatmul.mubr.f32.gmra.mrb[0].mxu0 %v1058
        %v1191 = vpop.f32.mrb[0].mxu0
        %v1192 = vadd.f32 0.0, %v1191
        %v1193 = vpop.f32.mrb[0].mxu0
        %1194 = vmatprep.mubr.f32.mxu0 0.0
        %1195 = vmatmul.mubr.f32.gmra.mrb[0].mxu0 %v1061
        %v1196 = vpop.f32.mrb[0].mxu0
        %v1197 = vadd.f32 0.0, %v1196
        %v1198 = vpop.f32.mrb[0].mxu0
        %1199 = vmatprep.mubr.f32.mxu0 0.0
        %1200 = vmatmul.mubr.f32.gmra.mrb[0].mxu0 %v1064
        %v1201 = vpop.f32.mrb[0].mxu0
        %v1202 = vadd.f32 0.0, %v1201
        %v1203 = vpop.f32.mrb[0].mxu0
        %1204 = vmatprep.mubr.f32.mxu0 0.0
        %1205 = vmatmul.mubr.f32.gmra.mrb[0].mxu0 %v1067
        %v1206 = vpop.f32.mrb[0].mxu0
        %v1207 = vadd.f32 0.0, %v1206
        %v1208 = vpop.f32.mrb[0].mxu0
        %1209 = vmatprep.mubr.f32.mxu0 0.0
        %1210 = vmatmul.mubr.f32.gmra.mrb[0].mxu0 %v1070
        %v1211 = vpop.f32.mrb[0].mxu0
        %v1212 = vadd.f32 0.0, %v1211
        %v1213 = vpop.f32.mrb[0].mxu0
        %1214 = vmatprep.mubr.f32.mxu0 0.0
        %1215 = vmatmul.mubr.f32.gmra.mrb[0].mxu0 %v1073
        %v1216 = vpop.f32.mrb[0].mxu0
        %v1217 = vadd.f32 0.0, %v1216
        %v1218 = vpop.f32.mrb[0].mxu0
        %1219 = vdwg.mxu0
        %v1221 = vsel %vm1026, %v865, 0
        %v1224 = vsel %vm1026, %v866, 0
        %v1227 = vsel %vm1026, %v867, 0
        %v1230 = vsel %vm1026, %v868, 0
        %v1233 = vsel %vm1026, %v869, 0
        %v1236 = vsel %vm1026, %v870, 0
        %v1239 = vsel %vm1026, %v871, 0
        %v1242 = vsel %vm1026, %v872, 0
        %v1245 = vsel %vm1026, %v873, 0
        %v1248 = vsel %vm1026, %v874, 0
        %v1251 = vsel %vm1026, %v875, 0
        %v1254 = vsel %vm1026, %v876, 0
        %v1257 = vsel %vm1026, %v877, 0
        %v1260 = vsel %vm1026, %v878, 0
        %v1263 = vsel %vm1026, %v879, 0
        %v1266 = vsel %vm1026, %v880, 0
        %1268 = vmatprep.subr.mxu0 0.0
        %1269 = vmatpush1.msra.mxu0 %v294
        %1270 = vmatprep.subr.mxu0 0.0
        %1271 = vmatpush1.msra.mxu0 %v295
        %1272 = vmatprep.subr.mxu0 0.0
        %1273 = vmatpush1.msra.mxu0 %v296
        %1274 = vmatprep.subr.mxu0 0.0
        %1275 = vmatpush1.msra.mxu0 %v297
        %1276 = vmatprep.subr.mxu0 0.0
        %1277 = vmatpush1.msra.mxu0 0.0
        %1278 = vmatprep.subr.mxu0 0.0
        %1279 = vmatpush1.msra.mxu0 0.0
        %1280 = vmatprep.subr.mxu0 0.0
        %1281 = vmatpush1.msra.mxu0 0.0
        %1282 = vmatprep.subr.mxu0 0.0
        %1283 = vmatpush1.msra.mxu0 0.0
        %1284 = vmatprep.subr.mxu0 0.0
        %1285 = vmatpush1.msra.mxu0 0.0
        %1286 = vmatprep.subr.mxu0 0.0
        %1287 = vmatpush1.msra.mxu0 0.0
        %1288 = vmatprep.subr.mxu0 0.0
        %1289 = vmatpush1.msra.mxu0 0.0
        %1290 = vmatprep.subr.mxu0 0.0
        %1291 = vmatpush1.msra.mxu0 0.0
        %1292 = vmatprep.subr.mxu0 0.0
        %1293 = vmatpush1.msra.mxu0 0.0
        %1294 = vmatprep.subr.mxu0 0.0
        %1295 = vmatpush1.msra.mxu0 0.0
        %1296 = vmatprep.subr.mxu0 0.0
        %1297 = vmatpush1.msra.mxu0 0.0
        %1298 = vmatprep.subr.mxu0 0.0
        %1299 = vmatpush1.msra.mxu0 0.0
        %1300 = vmatprep.subr.mxu0 0.0
        %1301 = vmatpush1.msra.mxu0 0.0
        %1302 = vmatprep.subr.mxu0 0.0
        %1303 = vmatpush1.msra.mxu0 0.0
        %1304 = vmatprep.subr.mxu0 0.0
        %1305 = vmatpush1.msra.mxu0 0.0
        %1306 = vmatprep.subr.mxu0 0.0
        %1307 = vmatpush1.msra.mxu0 0.0
        %1308 = vmatprep.subr.mxu0 0.0
        %1309 = vmatpush1.msra.mxu0 0.0
        %1310 = vmatprep.subr.mxu0 0.0
        %1311 = vmatpush1.msra.mxu0 0.0
        %1312 = vmatprep.subr.mxu0 0.0
        %1313 = vmatpush1.msra.mxu0 0.0
        %1314 = vmatprep.subr.mxu0 0.0
        %1315 = vmatpush1.msra.mxu0 0.0
        %1316 = vmatprep.subr.mxu0 0.0
        %1317 = vmatpush1.msra.mxu0 0.0
        %1318 = vmatprep.subr.mxu0 0.0
        %1319 = vmatpush1.msra.mxu0 0.0
        %1320 = vmatprep.subr.mxu0 0.0
        %1321 = vmatpush1.msra.mxu0 0.0
        %1322 = vmatprep.subr.mxu0 0.0
        %1323 = vmatpush1.msra.mxu0 0.0
        %1324 = vmatprep.subr.mxu0 0.0
        %1325 = vmatpush1.msra.mxu0 0.0
        %1326 = vmatprep.subr.mxu0 0.0
        %1327 = vmatpush1.msra.mxu0 0.0
        %1328 = vmatprep.subr.mxu0 0.0
        %1329 = vmatpush1.msra.mxu0 0.0
        %1330 = vmatprep.subr.mxu0 0.0
        %1331 = vmatpush1.msra.mxu0 0.0
        %1332 = vmatprep.mubr.f32.mxu0 0.0
        %1333 = vmatmul.mubr.f32.gmra.mrb[0].mxu0 %v1221
        %v1334 = vpop.f32.mrb[0].mxu0
        %v1335 = vadd.f32 %v1142, %v1334
        %v1336 = vpop.f32.mrb[0].mxu0
        %1337 = vmatprep.mubr.f32.mxu0 0.0
        %1338 = vmatmul.mubr.f32.gmra.mrb[0].mxu0 %v1224
        %v1339 = vpop.f32.mrb[0].mxu0
        %v1340 = vadd.f32 %v1147, %v1339
        %v1341 = vpop.f32.mrb[0].mxu0
        %1342 = vmatprep.mubr.f32.mxu0 0.0
        %1343 = vmatmul.mubr.f32.gmra.mrb[0].mxu0 %v1227
        %v1344 = vpop.f32.mrb[0].mxu0
        %v1345 = vadd.f32 %v1152, %v1344
        %v1346 = vpop.f32.mrb[0].mxu0
        %1347 = vmatprep.mubr.f32.mxu0 0.0
        %1348 = vmatmul.mubr.f32.gmra.mrb[0].mxu0 %v1230
        %v1349 = vpop.f32.mrb[0].mxu0
        %v1350 = vadd.f32 %v1157, %v1349
        %v1351 = vpop.f32.mrb[0].mxu0
        %1352 = vmatprep.mubr.f32.mxu0 0.0
        %1353 = vmatmul.mubr.f32.gmra.mrb[0].mxu0 %v1233
        %v1354 = vpop.f32.mrb[0].mxu0
        %v1355 = vadd.f32 %v1162, %v1354
        %v1356 = vpop.f32.mrb[0].mxu0
        %1357 = vmatprep.mubr.f32.mxu0 0.0
        %1358 = vmatmul.mubr.f32.gmra.mrb[0].mxu0 %v1236
        %v1359 = vpop.f32.mrb[0].mxu0
        %v1360 = vadd.f32 %v1167, %v1359
        %v1361 = vpop.f32.mrb[0].mxu0
        %1362 = vmatprep.mubr.f32.mxu0 0.0
        %1363 = vmatmul.mubr.f32.gmra.mrb[0].mxu0 %v1239
        %v1364 = vpop.f32.mrb[0].mxu0
        %v1365 = vadd.f32 %v1172, %v1364
        %v1366 = vpop.f32.mrb[0].mxu0
        %1367 = vmatprep.mubr.f32.mxu0 0.0
        %1368 = vmatmul.mubr.f32.gmra.mrb[0].mxu0 %v1242
        %v1369 = vpop.f32.mrb[0].mxu0
        %v1370 = vadd.f32 %v1177, %v1369
        %v1371 = vpop.f32.mrb[0].mxu0
        %1372 = vmatprep.mubr.f32.mxu0 0.0
        %1373 = vmatmul.mubr.f32.gmra.mrb[0].mxu0 %v1245
        %v1374 = vpop.f32.mrb[0].mxu0
        %v1375 = vadd.f32 %v1182, %v1374
        %v1376 = vpop.f32.mrb[0].mxu0
        %1377 = vmatprep.mubr.f32.mxu0 0.0
        %1378 = vmatmul.mubr.f32.gmra.mrb[0].mxu0 %v1248
        %v1379 = vpop.f32.mrb[0].mxu0
        %v1380 = vadd.f32 %v1187, %v1379
        %v1381 = vpop.f32.mrb[0].mxu0
        %1382 = vmatprep.mubr.f32.mxu0 0.0
        %1383 = vmatmul.mubr.f32.gmra.mrb[0].mxu0 %v1251
        %v1384 = vpop.f32.mrb[0].mxu0
        %v1385 = vadd.f32 %v1192, %v1384
        %v1386 = vpop.f32.mrb[0].mxu0
        %1387 = vmatprep.mubr.f32.mxu0 0.0
        %1388 = vmatmul.mubr.f32.gmra.mrb[0].mxu0 %v1254
        %v1389 = vpop.f32.mrb[0].mxu0
        %v1390 = vadd.f32 %v1197, %v1389
        %v1391 = vpop.f32.mrb[0].mxu0
        %1392 = vmatprep.mubr.f32.mxu0 0.0
        %1393 = vmatmul.mubr.f32.gmra.mrb[0].mxu0 %v1257
        %v1394 = vpop.f32.mrb[0].mxu0
        %v1395 = vadd.f32 %v1202, %v1394
        %v1396 = vpop.f32.mrb[0].mxu0
        %1397 = vmatprep.mubr.f32.mxu0 0.0
        %1398 = vmatmul.mubr.f32.gmra.mrb[0].mxu0 %v1260
        %v1399 = vpop.f32.mrb[0].mxu0
        %v1400 = vadd.f32 %v1207, %v1399
        %v1401 = vpop.f32.mrb[0].mxu0
        %1402 = vmatprep.mubr.f32.mxu0 0.0
        %1403 = vmatmul.mubr.f32.gmra.mrb[0].mxu0 %v1263
        %v1404 = vpop.f32.mrb[0].mxu0
        %v1405 = vadd.f32 %v1212, %v1404
        %v1406 = vpop.f32.mrb[0].mxu0
        %1407 = vmatprep.mubr.f32.mxu0 0.0
        %1408 = vmatmul.mubr.f32.gmra.mrb[0].mxu0 %v1266
        %v1409 = vpop.f32.mrb[0].mxu0
        %v1410 = vadd.f32 %v1217, %v1409
        %v1411 = vpop.f32.mrb[0].mxu0
        %1412 = vdwg.mxu0
        %v1413 = vlaneseq
        %v1414 = vshrl.u32 %v1413, 7
        %v1415 = vsub.s32 0, %v1414
        %v1416 = vrot.slane %v302, %v1415
        %v1417 = vadd.f32 %v1335, %v1416
        %v1418 = vadd.f32 %v1340, %v1416
        %v1419 = vadd.f32 %v1345, %v1416
        %v1420 = vadd.f32 %v1350, %v1416
        %v1421 = vadd.f32 %v1355, %v1416
        %v1422 = vadd.f32 %v1360, %v1416
        %v1423 = vadd.f32 %v1365, %v1416
        %v1424 = vadd.f32 %v1370, %v1416
        %v1425 = vadd.f32 %v1375, %v1416
        %v1426 = vadd.f32 %v1380, %v1416
        %v1427 = vadd.f32 %v1385, %v1416
        %v1428 = vadd.f32 %v1390, %v1416
        %v1429 = vadd.f32 %v1395, %v1416
        %v1430 = vadd.f32 %v1400, %v1416
        %v1431 = vadd.f32 %v1405, %v1416
        %v1432 = vadd.f32 %v1410, %v1416
        %v1433 = vmax.f32 %v1417, 0.0
        %v1434 = vmax.f32 %v1418, 0.0
        %v1435 = vmax.f32 %v1419, 0.0
        %v1436 = vmax.f32 %v1420, 0.0
        %v1437 = vmax.f32 %v1421, 0.0
        %v1438 = vmax.f32 %v1422, 0.0
        %v1439 = vmax.f32 %v1423, 0.0
        %v1440 = vmax.f32 %v1424, 0.0
        %v1441 = vmax.f32 %v1425, 0.0
        %v1442 = vmax.f32 %v1426, 0.0
        %v1443 = vmax.f32 %v1427, 0.0
        %v1444 = vmax.f32 %v1428, 0.0
        %v1445 = vmax.f32 %v1429, 0.0
        %v1446 = vmax.f32 %v1430, 0.0
        %v1447 = vmax.f32 %v1431, 0.0
        %v1448 = vmax.f32 %v1432, 0.0
        %1449 = vmatprep.subr.mxu0 0.0
        %1450 = vmatpush1.msra.mxu0 %v1433
        %1451 = vmatprep.subr.mxu0 0.0
        %1452 = vmatpush1.msra.mxu0 %v1434
        %1453 = vmatprep.subr.mxu0 0.0
        %1454 = vmatpush1.msra.mxu0 %v1435
        %1455 = vmatprep.subr.mxu0 0.0
        %1456 = vmatpush1.msra.mxu0 %v1436
        %1457 = vmatprep.subr.mxu0 0.0
        %1458 = vmatpush1.msra.mxu0 %v1437
        %1459 = vmatprep.subr.mxu0 0.0
        %1460 = vmatpush1.msra.mxu0 %v1438
        %1461 = vmatprep.subr.mxu0 0.0
        %1462 = vmatpush1.msra.mxu0 %v1439
        %1463 = vmatprep.subr.mxu0 0.0
        %1464 = vmatpush1.msra.mxu0 %v1440
        %1465 = vmatprep.subr.mxu0 0.0
        %1466 = vmatpush1.msra.mxu0 %v1441
        %1467 = vmatprep.subr.mxu0 0.0
        %1468 = vmatpush1.msra.mxu0 %v1442
        %1469 = vmatprep.subr.mxu0 0.0
        %1470 = vmatpush1.msra.mxu0 %v1443
        %1471 = vmatprep.subr.mxu0 0.0
        %1472 = vmatpush1.msra.mxu0 %v1444
        %1473 = vmatprep.subr.mxu0 0.0
        %1474 = vmatpush1.msra.mxu0 %v1445
        %1475 = vmatprep.subr.mxu0 0.0
        %1476 = vmatpush1.msra.mxu0 %v1446
        %1477 = vmatprep.subr.mxu0 0.0
        %1478 = vmatpush1.msra.mxu0 %v1447
        %1479 = vmatprep.subr.mxu0 0.0
        %1480 = vmatpush1.msra.mxu0 %v1448
        %1481 = vmatprep.subr.mxu0 0.0
        %1482 = vmatpush1.msra.mxu0 0.0
        %1483 = vmatprep.subr.mxu0 0.0
        %1484 = vmatpush1.msra.mxu0 0.0
        %1485 = vmatprep.subr.mxu0 0.0
        %1486 = vmatpush1.msra.mxu0 0.0
        %1487 = vmatprep.subr.mxu0 0.0
        %1488 = vmatpush1.msra.mxu0 0.0
        %1489 = vmatprep.subr.mxu0 0.0
        %1490 = vmatpush1.msra.mxu0 0.0
        %1491 = vmatprep.subr.mxu0 0.0
        %1492 = vmatpush1.msra.mxu0 0.0
        %1493 = vmatprep.subr.mxu0 0.0
        %1494 = vmatpush1.msra.mxu0 0.0
        %1495 = vmatprep.subr.mxu0 0.0
        %1496 = vmatpush1.msra.mxu0 0.0
        %1497 = vmatprep.subr.mxu0 0.0
        %1498 = vmatpush1.msra.mxu0 0.0
        %1499 = vmatprep.subr.mxu0 0.0
        %1500 = vmatpush1.msra.mxu0 0.0
        %1501 = vmatprep.subr.mxu0 0.0
        %1502 = vmatpush1.msra.mxu0 0.0
        %1503 = vmatprep.subr.mxu0 0.0
        %1504 = vmatpush1.msra.mxu0 0.0
        %1505 = vmatprep.subr.mxu0 0.0
        %1506 = vmatpush1.msra.mxu0 0.0
        %1507 = vmatprep.subr.mxu0 0.0
        %1508 = vmatpush1.msra.mxu0 0.0
        %1509 = vmatprep.subr.mxu0 0.0
        %1510 = vmatpush1.msra.mxu0 0.0
        %1511 = vmatprep.subr.mxu0 0.0
        %1512 = vmatpush1.msra.mxu0 0.0
        %1513 = vmatprep.mubr.f32.mxu0 0.0
        %1514 = vmatmul.mubr.f32.gmra.mrb[0].mxu0 %v275
        %v1515 = vpop.f32.mrb[0].mxu0
        %v1516 = vadd.f32 0.0, %v1515
        %v1517 = vpop.f32.mrb[0].mxu0
        %1518 = vmatprep.mubr.f32.mxu0 0.0
        %1519 = vmatmul.mubr.f32.gmra.mrb[0].mxu0 %v276
        %v1520 = vpop.f32.mrb[0].mxu0
        %v1521 = vadd.f32 0.0, %v1520
        %v1522 = vpop.f32.mrb[0].mxu0
        %1523 = vmatprep.mubr.f32.mxu0 0.0
        %1524 = vmatmul.mubr.f32.gmra.mrb[0].mxu0 %v277
        %v1525 = vpop.f32.mrb[0].mxu0
        %v1526 = vadd.f32 0.0, %v1525
        %v1527 = vpop.f32.mrb[0].mxu0
        %1528 = vmatprep.mubr.f32.mxu0 0.0
        %1529 = vmatmul.mubr.f32.gmra.mrb[0].mxu0 %v278
        %v1530 = vpop.f32.mrb[0].mxu0
        %v1531 = vadd.f32 0.0, %v1530
        %v1532 = vpop.f32.mrb[0].mxu0
        %1533 = vmatprep.mubr.f32.mxu0 0.0
        %1534 = vmatmul.mubr.f32.gmra.mrb[0].mxu0 %v279
        %v1535 = vpop.f32.mrb[0].mxu0
        %v1536 = vadd.f32 0.0, %v1535
        %v1537 = vpop.f32.mrb[0].mxu0
        %1538 = vmatprep.mubr.f32.mxu0 0.0
        %1539 = vmatmul.mubr.f32.gmra.mrb[0].mxu0 %v280
        %v1540 = vpop.f32.mrb[0].mxu0
        %v1541 = vadd.f32 0.0, %v1540
        %v1542 = vpop.f32.mrb[0].mxu0
        %1543 = vmatprep.mubr.f32.mxu0 0.0
        %1544 = vmatmul.mubr.f32.gmra.mrb[0].mxu0 %v281
        %v1545 = vpop.f32.mrb[0].mxu0
        %v1546 = vadd.f32 0.0, %v1545
        %v1547 = vpop.f32.mrb[0].mxu0
        %1548 = vmatprep.mubr.f32.mxu0 0.0
        %1549 = vmatmul.mubr.f32.gmra.mrb[0].mxu0 %v282
        %v1550 = vpop.f32.mrb[0].mxu0
        %v1551 = vadd.f32 0.0, %v1550
        %v1552 = vpop.f32.mrb[0].mxu0
        %1553 = vmatprep.mubr.f32.mxu0 0.0
        %1554 = vmatmul.mubr.f32.gmra.mrb[0].mxu0 %v283
        %v1555 = vpop.f32.mrb[0].mxu0
        %v1556 = vadd.f32 0.0, %v1555
        %v1557 = vpop.f32.mrb[0].mxu0
        %1558 = vmatprep.mubr.f32.mxu0 0.0
        %1559 = vmatmul.mubr.f32.gmra.mrb[0].mxu0 %v284
        %v1560 = vpop.f32.mrb[0].mxu0
        %v1561 = vadd.f32 0.0, %v1560
        %v1562 = vpop.f32.mrb[0].mxu0
        %1563 = vmatprep.mubr.f32.mxu0 0.0
        %1564 = vmatmul.mubr.f32.gmra.mrb[0].mxu0 %v285
        %v1565 = vpop.f32.mrb[0].mxu0
        %v1566 = vadd.f32 0.0, %v1565
        %v1567 = vpop.f32.mrb[0].mxu0
        %1568 = vmatprep.mubr.f32.mxu0 0.0
        %1569 = vmatmul.mubr.f32.gmra.mrb[0].mxu0 %v286
        %v1570 = vpop.f32.mrb[0].mxu0
        %v1571 = vadd.f32 0.0, %v1570
        %v1572 = vpop.f32.mrb[0].mxu0
        %1573 = vmatprep.mubr.f32.mxu0 0.0
        %1574 = vmatmul.mubr.f32.gmra.mrb[0].mxu0 %v287
        %v1575 = vpop.f32.mrb[0].mxu0
        %v1576 = vadd.f32 0.0, %v1575
        %v1577 = vpop.f32.mrb[0].mxu0
        %1578 = vmatprep.mubr.f32.mxu0 0.0
        %1579 = vmatmul.mubr.f32.gmra.mrb[0].mxu0 %v288
        %v1580 = vpop.f32.mrb[0].mxu0
        %v1581 = vadd.f32 0.0, %v1580
        %v1582 = vpop.f32.mrb[0].mxu0
        %1583 = vmatprep.mubr.f32.mxu0 0.0
        %1584 = vmatmul.mubr.f32.gmra.mrb[0].mxu0 %v289
        %v1585 = vpop.f32.mrb[0].mxu0
        %v1586 = vadd.f32 0.0, %v1585
        %v1587 = vpop.f32.mrb[0].mxu0
        %1588 = vmatprep.mubr.f32.mxu0 0.0
        %1589 = vmatmul.mubr.f32.gmra.mrb[0].mxu0 %v290
        %v1590 = vpop.f32.mrb[0].mxu0
        %v1591 = vadd.f32 0.0, %v1590
        %v1592 = vpop.f32.mrb[0].mxu0
        %1593 = vdwg.mxu0
        %v1594 = vlaneseq
        %v1595 = vshrl.u32 %v1594, 7
        %v1596 = vsub.s32 0, %v1595
        %v1597 = vrot.slane %v307, %v1596
        %v1599 = vsel %vm1026, %v1516, 0
        %v1602 = vsel %vm1026, %v1521, 0
        %v1605 = vsel %vm1026, %v1526, 0
        %v1608 = vsel %vm1026, %v1531, 0
        %v1611 = vsel %vm1026, %v1536, 0
        %v1614 = vsel %vm1026, %v1541, 0
        %v1617 = vsel %vm1026, %v1546, 0
        %v1620 = vsel %vm1026, %v1551, 0
        %v1623 = vsel %vm1026, %v1556, 0
        %v1626 = vsel %vm1026, %v1561, 0
        %v1629 = vsel %vm1026, %v1566, 0
        %v1632 = vsel %vm1026, %v1571, 0
        %v1635 = vsel %vm1026, %v1576, 0
        %v1638 = vsel %vm1026, %v1581, 0
        %v1641 = vsel %vm1026, %v1586, 0
        %v1644 = vsel %vm1026, %v1591, 0
        %1646 = vmatprep.subr.mxu0 0.0
        %1647 = vmatpush1.msra.mxu0 %v303
        %1648 = vmatprep.subr.mxu0 0.0
        %1649 = vmatpush1.msra.mxu0 %v304
        %1650 = vmatprep.subr.mxu0 0.0
        %1651 = vmatpush1.msra.mxu0 %v305
        %1652 = vmatprep.subr.mxu0 0.0
        %1653 = vmatpush1.msra.mxu0 %v306
        %1654 = vmatprep.subr.mxu0 0.0
        %1655 = vmatpush1.msra.mxu0 0.0
        %1656 = vmatprep.subr.mxu0 0.0
        %1657 = vmatpush1.msra.mxu0 0.0
        %1658 = vmatprep.subr.mxu0 0.0
        %1659 = vmatpush1.msra.mxu0 0.0
        %1660 = vmatprep.subr.mxu0 0.0
        %1661 = vmatpush1.msra.mxu0 0.0
        %1662 = vmatprep.subr.mxu0 0.0
        %1663 = vmatpush1.msra.mxu0 0.0
        %1664 = vmatprep.subr.mxu0 0.0
        %1665 = vmatpush1.msra.mxu0 0.0
        %1666 = vmatprep.subr.mxu0 0.0
        %1667 = vmatpush1.msra.mxu0 0.0
        %1668 = vmatprep.subr.mxu0 0.0
        %1669 = vmatpush1.msra.mxu0 0.0
        %1670 = vmatprep.subr.mxu0 0.0
        %1671 = vmatpush1.msra.mxu0 0.0
        %1672 = vmatprep.subr.mxu0 0.0
        %1673 = vmatpush1.msra.mxu0 0.0
        %1674 = vmatprep.subr.mxu0 0.0
        %1675 = vmatpush1.msra.mxu0 0.0
        %1676 = vmatprep.subr.mxu0 0.0
        %1677 = vmatpush1.msra.mxu0 0.0
        %1678 = vmatprep.subr.mxu0 0.0
        %1679 = vmatpush1.msra.mxu0 0.0
        %1680 = vmatprep.subr.mxu0 0.0
        %1681 = vmatpush1.msra.mxu0 0.0
        %1682 = vmatprep.subr.mxu0 0.0
        %1683 = vmatpush1.msra.mxu0 0.0
        %1684 = vmatprep.subr.mxu0 0.0
        %1685 = vmatpush1.msra.mxu0 0.0
        %1686 = vmatprep.subr.mxu0 0.0
        %1687 = vmatpush1.msra.mxu0 0.0
        %1688 = vmatprep.subr.mxu0 0.0
        %1689 = vmatpush1.msra.mxu0 0.0
        %1690 = vmatprep.subr.mxu0 0.0
        %1691 = vmatpush1.msra.mxu0 0.0
        %1692 = vmatprep.subr.mxu0 0.0
        %1693 = vmatpush1.msra.mxu0 0.0
        %1694 = vmatprep.subr.mxu0 0.0
        %1695 = vmatpush1.msra.mxu0 0.0
        %1696 = vmatprep.subr.mxu0 0.0
        %1697 = vmatpush1.msra.mxu0 0.0
        %1698 = vmatprep.subr.mxu0 0.0
        %1699 = vmatpush1.msra.mxu0 0.0
        %1700 = vmatprep.subr.mxu0 0.0
        %1701 = vmatpush1.msra.mxu0 0.0
        %1702 = vmatprep.subr.mxu0 0.0
        %1703 = vmatpush1.msra.mxu0 0.0
        %1704 = vmatprep.subr.mxu0 0.0
        %1705 = vmatpush1.msra.mxu0 0.0
        %1706 = vmatprep.subr.mxu0 0.0
        %1707 = vmatpush1.msra.mxu0 0.0
        %1708 = vmatprep.subr.mxu0 0.0
        %1709 = vmatpush1.msra.mxu0 0.0
        %1710 = vmatprep.mubr.f32.mxu0 0.0
        %1711 = vmatmul.mubr.f32.gmra.mrb[0].mxu0 %v1599
        %v1712 = vpop.f32.mrb[0].mxu0
        %v1713 = vadd.f32 %v1597, %v1712
        %v1714 = vpop.f32.mrb[0].mxu0
        %1715 = vmatprep.mubr.f32.mxu0 0.0
        %1716 = vmatmul.mubr.f32.gmra.mrb[0].mxu0 %v1602
        %v1717 = vpop.f32.mrb[0].mxu0
        %v1718 = vadd.f32 %v1597, %v1717
        %v1719 = vpop.f32.mrb[0].mxu0
        %1720 = vmatprep.mubr.f32.mxu0 0.0
        %1721 = vmatmul.mubr.f32.gmra.mrb[0].mxu0 %v1605
        %v1722 = vpop.f32.mrb[0].mxu0
        %v1723 = vadd.f32 %v1597, %v1722
        %v1724 = vpop.f32.mrb[0].mxu0
        %1725 = vmatprep.mubr.f32.mxu0 0.0
        %1726 = vmatmul.mubr.f32.gmra.mrb[0].mxu0 %v1608
        %v1727 = vpop.f32.mrb[0].mxu0
        %v1728 = vadd.f32 %v1597, %v1727
        %v1729 = vpop.f32.mrb[0].mxu0
        %1730 = vmatprep.mubr.f32.mxu0 0.0
        %1731 = vmatmul.mubr.f32.gmra.mrb[0].mxu0 %v1611
        %v1732 = vpop.f32.mrb[0].mxu0
        %v1733 = vadd.f32 %v1597, %v1732
        %v1734 = vpop.f32.mrb[0].mxu0
        %1735 = vmatprep.mubr.f32.mxu0 0.0
        %1736 = vmatmul.mubr.f32.gmra.mrb[0].mxu0 %v1614
        %v1737 = vpop.f32.mrb[0].mxu0
        %v1738 = vadd.f32 %v1597, %v1737
        %v1739 = vpop.f32.mrb[0].mxu0
        %1740 = vmatprep.mubr.f32.mxu0 0.0
        %1741 = vmatmul.mubr.f32.gmra.mrb[0].mxu0 %v1617
        %v1742 = vpop.f32.mrb[0].mxu0
        %v1743 = vadd.f32 %v1597, %v1742
        %v1744 = vpop.f32.mrb[0].mxu0
        %1745 = vmatprep.mubr.f32.mxu0 0.0
        %1746 = vmatmul.mubr.f32.gmra.mrb[0].mxu0 %v1620
        %v1747 = vpop.f32.mrb[0].mxu0
        %v1748 = vadd.f32 %v1597, %v1747
        %v1749 = vpop.f32.mrb[0].mxu0
        %1750 = vmatprep.mubr.f32.mxu0 0.0
        %1751 = vmatmul.mubr.f32.gmra.mrb[0].mxu0 %v1623
        %v1752 = vpop.f32.mrb[0].mxu0
        %v1753 = vadd.f32 %v1597, %v1752
        %v1754 = vpop.f32.mrb[0].mxu0
        %1755 = vmatprep.mubr.f32.mxu0 0.0
        %1756 = vmatmul.mubr.f32.gmra.mrb[0].mxu0 %v1626
        %v1757 = vpop.f32.mrb[0].mxu0
        %v1758 = vadd.f32 %v1597, %v1757
        %v1759 = vpop.f32.mrb[0].mxu0
        %1760 = vmatprep.mubr.f32.mxu0 0.0
        %1761 = vmatmul.mubr.f32.gmra.mrb[0].mxu0 %v1629
        %v1762 = vpop.f32.mrb[0].mxu0
        %v1763 = vadd.f32 %v1597, %v1762
        %v1764 = vpop.f32.mrb[0].mxu0
        %1765 = vmatprep.mubr.f32.mxu0 0.0
        %1766 = vmatmul.mubr.f32.gmra.mrb[0].mxu0 %v1632
        %v1767 = vpop.f32.mrb[0].mxu0
        %v1768 = vadd.f32 %v1597, %v1767
        %v1769 = vpop.f32.mrb[0].mxu0
        %1770 = vmatprep.mubr.f32.mxu0 0.0
        %1771 = vmatmul.mubr.f32.gmra.mrb[0].mxu0 %v1635
        %v1772 = vpop.f32.mrb[0].mxu0
        %v1773 = vadd.f32 %v1597, %v1772
        %v1774 = vpop.f32.mrb[0].mxu0
        %1775 = vmatprep.mubr.f32.mxu0 0.0
        %1776 = vmatmul.mubr.f32.gmra.mrb[0].mxu0 %v1638
        %v1777 = vpop.f32.mrb[0].mxu0
        %v1778 = vadd.f32 %v1597, %v1777
        %v1779 = vpop.f32.mrb[0].mxu0
        %1780 = vmatprep.mubr.f32.mxu0 0.0
        %1781 = vmatmul.mubr.f32.gmra.mrb[0].mxu0 %v1641
        %v1782 = vpop.f32.mrb[0].mxu0
        %v1783 = vadd.f32 %v1597, %v1782
        %v1784 = vpop.f32.mrb[0].mxu0
        %1785 = vmatprep.mubr.f32.mxu0 0.0
        %1786 = vmatmul.mubr.f32.gmra.mrb[0].mxu0 %v1644
        %v1787 = vpop.f32.mrb[0].mxu0
        %v1788 = vadd.f32 %v1597, %v1787
        %v1789 = vpop.f32.mrb[0].mxu0
        %1790 = vdwg.mxu0
        %v1791 = vmax.f32 %v1713, 0.0
        %v1792 = vmax.f32 %v1718, 0.0
        %v1793 = vmax.f32 %v1723, 0.0
        %v1794 = vmax.f32 %v1728, 0.0
        %v1795 = vmax.f32 %v1733, 0.0
        %v1796 = vmax.f32 %v1738, 0.0
        %v1797 = vmax.f32 %v1743, 0.0
        %v1798 = vmax.f32 %v1748, 0.0
        %v1799 = vmax.f32 %v1753, 0.0
        %v1800 = vmax.f32 %v1758, 0.0
        %v1801 = vmax.f32 %v1763, 0.0
        %v1802 = vmax.f32 %v1768, 0.0
        %v1803 = vmax.f32 %v1773, 0.0
        %v1804 = vmax.f32 %v1778, 0.0
        %v1805 = vmax.f32 %v1783, 0.0
        %v1806 = vmax.f32 %v1788, 0.0
        %v1807 = vlaneseq
        %v1808 = vshrl.u32 %v1807, 7
        %v1809 = vsub.s32 0, %v1808
        %v1810 = vrot.slane %v312, %v1809
        %v1812 = vsel %vm1026, %v1791, 0
        %v1815 = vsel %vm1026, %v1792, 0
        %v1818 = vsel %vm1026, %v1793, 0
        %v1821 = vsel %vm1026, %v1794, 0
        %v1824 = vsel %vm1026, %v1795, 0
        %v1827 = vsel %vm1026, %v1796, 0
        %v1830 = vsel %vm1026, %v1797, 0
        %v1833 = vsel %vm1026, %v1798, 0
        %v1836 = vsel %vm1026, %v1799, 0
        %v1839 = vsel %vm1026, %v1800, 0
        %v1842 = vsel %vm1026, %v1801, 0
        %v1845 = vsel %vm1026, %v1802, 0
        %v1848 = vsel %vm1026, %v1803, 0
        %v1851 = vsel %vm1026, %v1804, 0
        %v1854 = vsel %vm1026, %v1805, 0
        %v1857 = vsel %vm1026, %v1806, 0
        %1859 = vmatprep.subr.mxu0 0.0
        %1860 = vmatpush1.msra.mxu0 %v308
        %1861 = vmatprep.subr.mxu0 0.0
        %1862 = vmatpush1.msra.mxu0 %v309
        %1863 = vmatprep.subr.mxu0 0.0
        %1864 = vmatpush1.msra.mxu0 %v310
        %1865 = vmatprep.subr.mxu0 0.0
        %1866 = vmatpush1.msra.mxu0 %v311
        %1867 = vmatprep.subr.mxu0 0.0
        %1868 = vmatpush1.msra.mxu0 0.0
        %1869 = vmatprep.subr.mxu0 0.0
        %1870 = vmatpush1.msra.mxu0 0.0
        %1871 = vmatprep.subr.mxu0 0.0
        %1872 = vmatpush1.msra.mxu0 0.0
        %1873 = vmatprep.subr.mxu0 0.0
        %1874 = vmatpush1.msra.mxu0 0.0
        %1875 = vmatprep.subr.mxu0 0.0
        %1876 = vmatpush1.msra.mxu0 0.0
        %1877 = vmatprep.subr.mxu0 0.0
        %1878 = vmatpush1.msra.mxu0 0.0
        %1879 = vmatprep.subr.mxu0 0.0
        %1880 = vmatpush1.msra.mxu0 0.0
        %1881 = vmatprep.subr.mxu0 0.0
        %1882 = vmatpush1.msra.mxu0 0.0
        %1883 = vmatprep.subr.mxu0 0.0
        %1884 = vmatpush1.msra.mxu0 0.0
        %1885 = vmatprep.subr.mxu0 0.0
        %1886 = vmatpush1.msra.mxu0 0.0
        %1887 = vmatprep.subr.mxu0 0.0
        %1888 = vmatpush1.msra.mxu0 0.0
        %1889 = vmatprep.subr.mxu0 0.0
        %1890 = vmatpush1.msra.mxu0 0.0
        %1891 = vmatprep.subr.mxu0 0.0
        %1892 = vmatpush1.msra.mxu0 0.0
        %1893 = vmatprep.subr.mxu0 0.0
        %1894 = vmatpush1.msra.mxu0 0.0
        %1895 = vmatprep.subr.mxu0 0.0
        %1896 = vmatpush1.msra.mxu0 0.0
        %1897 = vmatprep.subr.mxu0 0.0
        %1898 = vmatpush1.msra.mxu0 0.0
        %1899 = vmatprep.subr.mxu0 0.0
        %1900 = vmatpush1.msra.mxu0 0.0
        %1901 = vmatprep.subr.mxu0 0.0
        %1902 = vmatpush1.msra.mxu0 0.0
        %1903 = vmatprep.subr.mxu0 0.0
        %1904 = vmatpush1.msra.mxu0 0.0
        %1905 = vmatprep.subr.mxu0 0.0
        %1906 = vmatpush1.msra.mxu0 0.0
        %1907 = vmatprep.subr.mxu0 0.0
        %1908 = vmatpush1.msra.mxu0 0.0
        %1909 = vmatprep.subr.mxu0 0.0
        %1910 = vmatpush1.msra.mxu0 0.0
        %1911 = vmatprep.subr.mxu0 0.0
        %1912 = vmatpush1.msra.mxu0 0.0
        %1913 = vmatprep.subr.mxu0 0.0
        %1914 = vmatpush1.msra.mxu0 0.0
        %1915 = vmatprep.subr.mxu0 0.0
        %1916 = vmatpush1.msra.mxu0 0.0
        %1917 = vmatprep.subr.mxu0 0.0
        %1918 = vmatpush1.msra.mxu0 0.0
        %1919 = vmatprep.subr.mxu0 0.0
        %1920 = vmatpush1.msra.mxu0 0.0
        %1921 = vmatprep.subr.mxu0 0.0
        %1922 = vmatpush1.msra.mxu0 0.0
        %1923 = vmatprep.mubr.f32.mxu0 0.0
        %1924 = vmatmul.mubr.f32.gmra.mrb[0].mxu0 %v1812
        %v1925 = vpop.f32.mrb[0].mxu0
        %v1926 = vadd.f32 %v1810, %v1925
        %v1927 = vpop.f32.mrb[0].mxu0
        %1928 = vmatprep.mubr.f32.mxu0 0.0
        %1929 = vmatmul.mubr.f32.gmra.mrb[0].mxu0 %v1815
        %v1930 = vpop.f32.mrb[0].mxu0
        %v1931 = vadd.f32 %v1810, %v1930
        %v1932 = vpop.f32.mrb[0].mxu0
        %1933 = vmatprep.mubr.f32.mxu0 0.0
        %1934 = vmatmul.mubr.f32.gmra.mrb[0].mxu0 %v1818
        %v1935 = vpop.f32.mrb[0].mxu0
        %v1936 = vadd.f32 %v1810, %v1935
        %v1937 = vpop.f32.mrb[0].mxu0
        %1938 = vmatprep.mubr.f32.mxu0 0.0
        %1939 = vmatmul.mubr.f32.gmra.mrb[0].mxu0 %v1821
        %v1940 = vpop.f32.mrb[0].mxu0
        %v1941 = vadd.f32 %v1810, %v1940
        %v1942 = vpop.f32.mrb[0].mxu0
        %1943 = vmatprep.mubr.f32.mxu0 0.0
        %1944 = vmatmul.mubr.f32.gmra.mrb[0].mxu0 %v1824
        %v1945 = vpop.f32.mrb[0].mxu0
        %v1946 = vadd.f32 %v1810, %v1945
        %v1947 = vpop.f32.mrb[0].mxu0
        %1948 = vmatprep.mubr.f32.mxu0 0.0
        %1949 = vmatmul.mubr.f32.gmra.mrb[0].mxu0 %v1827
        %v1950 = vpop.f32.mrb[0].mxu0
        %v1951 = vadd.f32 %v1810, %v1950
        %v1952 = vpop.f32.mrb[0].mxu0
        %1953 = vmatprep.mubr.f32.mxu0 0.0
        %1954 = vmatmul.mubr.f32.gmra.mrb[0].mxu0 %v1830
        %v1955 = vpop.f32.mrb[0].mxu0
        %v1956 = vadd.f32 %v1810, %v1955
        %v1957 = vpop.f32.mrb[0].mxu0
        %1958 = vmatprep.mubr.f32.mxu0 0.0
        %1959 = vmatmul.mubr.f32.gmra.mrb[0].mxu0 %v1833
        %v1960 = vpop.f32.mrb[0].mxu0
        %v1961 = vadd.f32 %v1810, %v1960
        %v1962 = vpop.f32.mrb[0].mxu0
        %1963 = vmatprep.mubr.f32.mxu0 0.0
        %1964 = vmatmul.mubr.f32.gmra.mrb[0].mxu0 %v1836
        %v1965 = vpop.f32.mrb[0].mxu0
        %v1966 = vadd.f32 %v1810, %v1965
        %v1967 = vpop.f32.mrb[0].mxu0
        %1968 = vmatprep.mubr.f32.mxu0 0.0
        %1969 = vmatmul.mubr.f32.gmra.mrb[0].mxu0 %v1839
        %v1970 = vpop.f32.mrb[0].mxu0
        %v1971 = vadd.f32 %v1810, %v1970
        %v1972 = vpop.f32.mrb[0].mxu0
        %1973 = vmatprep.mubr.f32.mxu0 0.0
        %1974 = vmatmul.mubr.f32.gmra.mrb[0].mxu0 %v1842
        %v1975 = vpop.f32.mrb[0].mxu0
        %v1976 = vadd.f32 %v1810, %v1975
        %v1977 = vpop.f32.mrb[0].mxu0
        %1978 = vmatprep.mubr.f32.mxu0 0.0
        %1979 = vmatmul.mubr.f32.gmra.mrb[0].mxu0 %v1845
        %v1980 = vpop.f32.mrb[0].mxu0
        %v1981 = vadd.f32 %v1810, %v1980
        %v1982 = vpop.f32.mrb[0].mxu0
        %1983 = vmatprep.mubr.f32.mxu0 0.0
        %1984 = vmatmul.mubr.f32.gmra.mrb[0].mxu0 %v1848
        %v1985 = vpop.f32.mrb[0].mxu0
        %v1986 = vadd.f32 %v1810, %v1985
        %v1987 = vpop.f32.mrb[0].mxu0
        %1988 = vmatprep.mubr.f32.mxu0 0.0
        %1989 = vmatmul.mubr.f32.gmra.mrb[0].mxu0 %v1851
        %v1990 = vpop.f32.mrb[0].mxu0
        %v1991 = vadd.f32 %v1810, %v1990
        %v1992 = vpop.f32.mrb[0].mxu0
        %1993 = vmatprep.mubr.f32.mxu0 0.0
        %1994 = vmatmul.mubr.f32.gmra.mrb[0].mxu0 %v1854
        %v1995 = vpop.f32.mrb[0].mxu0
        %v1996 = vadd.f32 %v1810, %v1995
        %v1997 = vpop.f32.mrb[0].mxu0
        %1998 = vmatprep.mubr.f32.mxu0 0.0
        %1999 = vmatmul.mubr.f32.gmra.mrb[0].mxu0 %v1857
        %v2000 = vpop.f32.mrb[0].mxu0
        %v2001 = vadd.f32 %v1810, %v2000
        %v2002 = vpop.f32.mrb[0].mxu0
        %2003 = vdwg.mxu0
        %2020 = vrot.lane.b32.xlu0 %v1926, 127
        %v2021 = vpop.permute.xlu0 %2020
        %2022 = vrot.lane.b32.xlu0 %v1931, 127
        %v2023 = vpop.permute.xlu0 %2022
        %2024 = vrot.lane.b32.xlu0 %v1936, 127
        %v2025 = vpop.permute.xlu0 %2024
        %2026 = vrot.lane.b32.xlu0 %v1941, 127
        %v2027 = vpop.permute.xlu0 %2026
        %2028 = vrot.lane.b32.xlu0 %v1946, 127
        %v2029 = vpop.permute.xlu0 %2028
        %2030 = vrot.lane.b32.xlu0 %v1951, 127
        %v2031 = vpop.permute.xlu0 %2030
        %2032 = vrot.lane.b32.xlu0 %v1956, 127
        %v2033 = vpop.permute.xlu0 %2032
        %2034 = vrot.lane.b32.xlu0 %v1961, 127
        %v2035 = vpop.permute.xlu0 %2034
        %2036 = vrot.lane.b32.xlu0 %v1966, 127
        %v2037 = vpop.permute.xlu0 %2036
        %2038 = vrot.lane.b32.xlu0 %v1971, 127
        %v2039 = vpop.permute.xlu0 %2038
        %2040 = vrot.lane.b32.xlu0 %v1976, 127
        %v2041 = vpop.permute.xlu0 %2040
        %2042 = vrot.lane.b32.xlu0 %v1981, 127
        %v2043 = vpop.permute.xlu0 %2042
        %2044 = vrot.lane.b32.xlu0 %v1986, 127
        %v2045 = vpop.permute.xlu0 %2044
        %2046 = vrot.lane.b32.xlu0 %v1991, 127
        %v2047 = vpop.permute.xlu0 %2046
        %2048 = vrot.lane.b32.xlu0 %v1996, 127
        %v2049 = vpop.permute.xlu0 %2048
        %2050 = vrot.lane.b32.xlu0 %v2001, 127
        %v2051 = vpop.permute.xlu0 %2050
        %v2068 = vsub.f32 %v1926, %v2021
        %v2069 = vsub.f32 %v1931, %v2023
        %v2070 = vsub.f32 %v1936, %v2025
        %v2071 = vsub.f32 %v1941, %v2027
        %v2072 = vsub.f32 %v1946, %v2029
        %v2073 = vsub.f32 %v1951, %v2031
        %v2074 = vsub.f32 %v1956, %v2033
        %v2075 = vsub.f32 %v1961, %v2035
        %v2076 = vsub.f32 %v1966, %v2037
        %v2077 = vsub.f32 %v1971, %v2039
        %v2078 = vsub.f32 %v1976, %v2041
        %v2079 = vsub.f32 %v1981, %v2043
        %v2080 = vsub.f32 %v1986, %v2045
        %v2081 = vsub.f32 %v1991, %v2047
        %v2082 = vsub.f32 %v1996, %v2049
        %v2083 = vsub.f32 %v2001, %v2051
        %v2084 = vsub.f32 0.0, %v2068
        %v2085 = vsub.f32 0.0, %v2069
        %v2086 = vsub.f32 0.0, %v2070
        %v2087 = vsub.f32 0.0, %v2071
        %v2088 = vsub.f32 0.0, %v2072
        %v2089 = vsub.f32 0.0, %v2073
        %v2090 = vsub.f32 0.0, %v2074
        %v2091 = vsub.f32 0.0, %v2075
        %v2092 = vsub.f32 0.0, %v2076
        %v2093 = vsub.f32 0.0, %v2077
        %v2094 = vsub.f32 0.0, %v2078
        %v2095 = vsub.f32 0.0, %v2079
        %v2096 = vsub.f32 0.0, %v2080
        %v2097 = vsub.f32 0.0, %v2081
        %v2098 = vsub.f32 0.0, %v2082
        %v2099 = vsub.f32 0.0, %v2083
        %v2100 = vmul.f32 %v2084, 1.442695
        %v2101 = vpow.pop %v2100
        %v2102 = vmul.f32 %v2085, 1.442695
        %v2103 = vpow.pop %v2102
        %v2104 = vmul.f32 %v2086, 1.442695
        %v2105 = vpow.pop %v2104
        %v2106 = vmul.f32 %v2087, 1.442695
        %v2107 = vpow.pop %v2106
        %v2108 = vmul.f32 %v2088, 1.442695
        %v2109 = vpow.pop %v2108
        %v2110 = vmul.f32 %v2089, 1.442695
        %v2111 = vpow.pop %v2110
        %v2112 = vmul.f32 %v2090, 1.442695
        %v2113 = vpow.pop %v2112
        %v2114 = vmul.f32 %v2091, 1.442695
        %v2115 = vpow.pop %v2114
        %v2116 = vmul.f32 %v2092, 1.442695
        %v2117 = vpow.pop %v2116
        %v2118 = vmul.f32 %v2093, 1.442695
        %v2119 = vpow.pop %v2118
        %v2120 = vmul.f32 %v2094, 1.442695
        %v2121 = vpow.pop %v2120
        %v2122 = vmul.f32 %v2095, 1.442695
        %v2123 = vpow.pop %v2122
        %v2124 = vmul.f32 %v2096, 1.442695
        %v2125 = vpow.pop %v2124
        %v2126 = vmul.f32 %v2097, 1.442695
        %v2127 = vpow.pop %v2126
        %v2128 = vmul.f32 %v2098, 1.442695
        %v2129 = vpow.pop %v2128
        %v2130 = vmul.f32 %v2099, 1.442695
        %v2131 = vpow.pop %v2130
        %v2132 = vadd.f32 %v2101, 1.0
        %v2133 = vadd.f32 %v2103, 1.0
        %v2134 = vadd.f32 %v2105, 1.0
        %v2135 = vadd.f32 %v2107, 1.0
        %v2136 = vadd.f32 %v2109, 1.0
        %v2137 = vadd.f32 %v2111, 1.0
        %v2138 = vadd.f32 %v2113, 1.0
        %v2139 = vadd.f32 %v2115, 1.0
        %v2140 = vadd.f32 %v2117, 1.0
        %v2141 = vadd.f32 %v2119, 1.0
        %v2142 = vadd.f32 %v2121, 1.0
        %v2143 = vadd.f32 %v2123, 1.0
        %v2144 = vadd.f32 %v2125, 1.0
        %v2145 = vadd.f32 %v2127, 1.0
        %v2146 = vadd.f32 %v2129, 1.0
        %v2147 = vadd.f32 %v2131, 1.0
        %v2148 = vrcp.pop %v2132
        %v2149 = vmul.f32 1.0, %v2148
        %v2150 = vrcp.pop %v2133
        %v2151 = vmul.f32 1.0, %v2150
        %v2152 = vrcp.pop %v2134
        %v2153 = vmul.f32 1.0, %v2152
        %v2154 = vrcp.pop %v2135
        %v2155 = vmul.f32 1.0, %v2154
        %v2156 = vrcp.pop %v2136
        %v2157 = vmul.f32 1.0, %v2156
        %v2158 = vrcp.pop %v2137
        %v2159 = vmul.f32 1.0, %v2158
        %v2160 = vrcp.pop %v2138
        %v2161 = vmul.f32 1.0, %v2160
        %v2162 = vrcp.pop %v2139
        %v2163 = vmul.f32 1.0, %v2162
        %v2164 = vrcp.pop %v2140
        %v2165 = vmul.f32 1.0, %v2164
        %v2166 = vrcp.pop %v2141
        %v2167 = vmul.f32 1.0, %v2166
        %v2168 = vrcp.pop %v2142
        %v2169 = vmul.f32 1.0, %v2168
        %v2170 = vrcp.pop %v2143
        %v2171 = vmul.f32 1.0, %v2170
        %v2172 = vrcp.pop %v2144
        %v2173 = vmul.f32 1.0, %v2172
        %v2174 = vrcp.pop %v2145
        %v2175 = vmul.f32 1.0, %v2174
        %v2176 = vrcp.pop %v2146
        %v2177 = vmul.f32 1.0, %v2176
        %v2178 = vrcp.pop %v2147
        %v2179 = vmul.f32 1.0, %v2178
        %v2180 = vsub.f32 1.0, %v2149
        %v2181 = vsub.f32 1.0, %v2151
        %v2182 = vsub.f32 1.0, %v2153
        %v2183 = vsub.f32 1.0, %v2155
        %v2184 = vsub.f32 1.0, %v2157
        %v2185 = vsub.f32 1.0, %v2159
        %v2186 = vsub.f32 1.0, %v2161
        %v2187 = vsub.f32 1.0, %v2163
        %v2188 = vsub.f32 1.0, %v2165
        %v2189 = vsub.f32 1.0, %v2167
        %v2190 = vsub.f32 1.0, %v2169
        %v2191 = vsub.f32 1.0, %v2171
        %v2192 = vsub.f32 1.0, %v2173
        %v2193 = vsub.f32 1.0, %v2175
        %v2194 = vsub.f32 1.0, %v2177
        %v2195 = vsub.f32 1.0, %v2179
        %v2196 = vlaneseq
        %v2197 = vand.u32 %v2196, 127
        %vm2198 = vcmp.eq.s32.totalorder %v2197, 0
        %vm2199 = vcmp.eq.s32.totalorder %v2197, 1
        %2201 = vset.pattern.permute.xlu0 0
        %2202 = vperm.xlu0 %2201, %v2180
        %v2203 = vpop.permute.xlu0 %2202
        %2206 = vset.pattern.permute.xlu0 0
        %2207 = vperm.xlu0 %2206, %v2181
        %v2208 = vpop.permute.xlu0 %2207
        %2211 = vset.pattern.permute.xlu0 0
        %2212 = vperm.xlu0 %2211, %v2182
        %v2213 = vpop.permute.xlu0 %2212
        %2216 = vset.pattern.permute.xlu0 0
        %2217 = vperm.xlu0 %2216, %v2183
        %v2218 = vpop.permute.xlu0 %2217
        %2221 = vset.pattern.permute.xlu0 0
        %2222 = vperm.xlu0 %2221, %v2184
        %v2223 = vpop.permute.xlu0 %2222
        %2226 = vset.pattern.permute.xlu0 0
        %2227 = vperm.xlu0 %2226, %v2185
        %v2228 = vpop.permute.xlu0 %2227
        %2231 = vset.pattern.permute.xlu0 0
        %2232 = vperm.xlu0 %2231, %v2186
        %v2233 = vpop.permute.xlu0 %2232
        %2236 = vset.pattern.permute.xlu0 0
        %2237 = vperm.xlu0 %2236, %v2187
        %v2238 = vpop.permute.xlu0 %2237
        %2241 = vset.pattern.permute.xlu0 0
        %2242 = vperm.xlu0 %2241, %v2188
        %v2243 = vpop.permute.xlu0 %2242
        %2246 = vset.pattern.permute.xlu0 0
        %2247 = vperm.xlu0 %2246, %v2189
        %v2248 = vpop.permute.xlu0 %2247
        %2251 = vset.pattern.permute.xlu0 0
        %2252 = vperm.xlu0 %2251, %v2190
        %v2253 = vpop.permute.xlu0 %2252
        %2256 = vset.pattern.permute.xlu0 0
        %2257 = vperm.xlu0 %2256, %v2191
        %v2258 = vpop.permute.xlu0 %2257
        %2261 = vset.pattern.permute.xlu0 0
        %2262 = vperm.xlu0 %2261, %v2192
        %v2263 = vpop.permute.xlu0 %2262
        %2266 = vset.pattern.permute.xlu0 0
        %2267 = vperm.xlu0 %2266, %v2193
        %v2268 = vpop.permute.xlu0 %2267
        %2271 = vset.pattern.permute.xlu0 0
        %2272 = vperm.xlu0 %2271, %v2194
        %v2273 = vpop.permute.xlu0 %2272
        %2276 = vset.pattern.permute.xlu0 0
        %2277 = vperm.xlu0 %2276, %v2195
        %v2278 = vpop.permute.xlu0 %2277
        %v2280 = vsel %vm2199, %v2203, 0.0
        %v2281 = vsel %vm2199, %v2208, 0.0
        %v2282 = vsel %vm2199, %v2213, 0.0
        %v2283 = vsel %vm2199, %v2218, 0.0
        %v2284 = vsel %vm2199, %v2223, 0.0
        %v2285 = vsel %vm2199, %v2228, 0.0
        %v2286 = vsel %vm2199, %v2233, 0.0
        %v2287 = vsel %vm2199, %v2238, 0.0
        %v2288 = vsel %vm2199, %v2243, 0.0
        %v2289 = vsel %vm2199, %v2248, 0.0
        %v2290 = vsel %vm2199, %v2253, 0.0
        %v2291 = vsel %vm2199, %v2258, 0.0
        %v2292 = vsel %vm2199, %v2263, 0.0
        %v2293 = vsel %vm2199, %v2268, 0.0
        %v2294 = vsel %vm2199, %v2273, 0.0
        %v2295 = vsel %vm2199, %v2278, 0.0
        %2297 = vset.pattern.permute.xlu0 0
        %2298 = vperm.xlu0 %2297, %v2149
        %v2299 = vpop.permute.xlu0 %2298
        %2302 = vset.pattern.permute.xlu0 0
        %2303 = vperm.xlu0 %2302, %v2151
        %v2304 = vpop.permute.xlu0 %2303
        %2307 = vset.pattern.permute.xlu0 0
        %2308 = vperm.xlu0 %2307, %v2153
        %v2309 = vpop.permute.xlu0 %2308
        %2312 = vset.pattern.permute.xlu0 0
        %2313 = vperm.xlu0 %2312, %v2155
        %v2314 = vpop.permute.xlu0 %2313
        %2317 = vset.pattern.permute.xlu0 0
        %2318 = vperm.xlu0 %2317, %v2157
        %v2319 = vpop.permute.xlu0 %2318
        %2322 = vset.pattern.permute.xlu0 0
        %2323 = vperm.xlu0 %2322, %v2159
        %v2324 = vpop.permute.xlu0 %2323
        %2327 = vset.pattern.permute.xlu0 0
        %2328 = vperm.xlu0 %2327, %v2161
        %v2329 = vpop.permute.xlu0 %2328
        %2332 = vset.pattern.permute.xlu0 0
        %2333 = vperm.xlu0 %2332, %v2163
        %v2334 = vpop.permute.xlu0 %2333
        %2337 = vset.pattern.permute.xlu0 0
        %2338 = vperm.xlu0 %2337, %v2165
        %v2339 = vpop.permute.xlu0 %2338
        %2342 = vset.pattern.permute.xlu0 0
        %2343 = vperm.xlu0 %2342, %v2167
        %v2344 = vpop.permute.xlu0 %2343
        %2347 = vset.pattern.permute.xlu0 0
        %2348 = vperm.xlu0 %2347, %v2169
        %v2349 = vpop.permute.xlu0 %2348
        %2352 = vset.pattern.permute.xlu0 0
        %2353 = vperm.xlu0 %2352, %v2171
        %v2354 = vpop.permute.xlu0 %2353
        %2357 = vset.pattern.permute.xlu0 0
        %2358 = vperm.xlu0 %2357, %v2173
        %v2359 = vpop.permute.xlu0 %2358
        %2362 = vset.pattern.permute.xlu0 0
        %2363 = vperm.xlu0 %2362, %v2175
        %v2364 = vpop.permute.xlu0 %2363
        %2367 = vset.pattern.permute.xlu0 0
        %2368 = vperm.xlu0 %2367, %v2177
        %v2369 = vpop.permute.xlu0 %2368
        %2372 = vset.pattern.permute.xlu0 0
        %2373 = vperm.xlu0 %2372, %v2179
        %v2374 = vpop.permute.xlu0 %2373
        %v2376 = vsel %vm2198, %v2299, %v2280
        %v2377 = vsel %vm2198, %v2304, %v2281
        %v2378 = vsel %vm2198, %v2309, %v2282
        %v2379 = vsel %vm2198, %v2314, %v2283
        %v2380 = vsel %vm2198, %v2319, %v2284
        %v2381 = vsel %vm2198, %v2324, %v2285
        %v2382 = vsel %vm2198, %v2329, %v2286
        %v2383 = vsel %vm2198, %v2334, %v2287
        %v2384 = vsel %vm2198, %v2339, %v2288
        %v2385 = vsel %vm2198, %v2344, %v2289
        %v2386 = vsel %vm2198, %v2349, %v2290
        %v2387 = vsel %vm2198, %v2354, %v2291
        %v2388 = vsel %vm2198, %v2359, %v2292
        %v2389 = vsel %vm2198, %v2364, %v2293
        %v2390 = vsel %vm2198, %v2369, %v2294
        %v2391 = vsel %vm2198, %v2374, %v2295
        %2392 = vst [vmem:[%s223] sm:$0xff] %v2376
        %2393 = vst [vmem:[%s223 + $0x8] sm:$0xff] %v2377
        %2394 = vst [vmem:[%s223 + $0x10] sm:$0xff] %v2378
        %2395 = vst [vmem:[%s223 + $0x18] sm:$0xff] %v2379
        %2396 = vst [vmem:[%s223 + $0x20] sm:$0xff] %v2380
        %2397 = vst [vmem:[%s223 + $0x28] sm:$0xff] %v2381
        %2398 = vst [vmem:[%s223 + $0x30] sm:$0xff] %v2382
        %2399 = vst [vmem:[%s223 + $0x38] sm:$0xff] %v2383
        %2400 = vst [vmem:[%s223 + $0x40] sm:$0xff] %v2384
        %2401 = vst [vmem:[%s223 + $0x48] sm:$0xff] %v2385
        %2402 = vst [vmem:[%s223 + $0x50] sm:$0xff] %v2386
        %2403 = vst [vmem:[%s223 + $0x58] sm:$0xff] %v2387
        %2404 = vst [vmem:[%s223 + $0x60] sm:$0xff] %v2388
        %2405 = vst [vmem:[%s223 + $0x68] sm:$0xff] %v2389
        %2406 = vst [vmem:[%s223 + $0x70] sm:$0xff] %v2390
        %2407 = vst [vmem:[%s223 + $0x78] sm:$0xff] %v2391
        %s2408 = sand.u32 %s125, 1
        %s2409 = scalar_lea.sflag [#allocation3], %s2408
        %s2410 = sand.u32 %s125, 1
        %s2411 = smul.addr %s2410, 128
        %s2412 = scalar_lea.vmem [#allocation2], %s2411
        // Predicated region
        $region37: #{tpu_custom_call.1} parent=35 // pred_check
          %p2413 = pneg %p135
        $region38: #{tpu_custom_call.1} parent=35 // pred_check_branch
          %2415 = sbr.rel (%p2413) target = $region40
        $region39: #{tpu_custom_call.1} parent=35 // pred_region
          %s2416 = smul.u32 16, %s18
          %s2418 = ssub.s32 2048, 2048
          %2419 = vsyncadd %s2409, %s2418
          %s2420 = smul.addr %s2416, 128
          %s2421 = scalar_lea.hbm %s4, %s2420
          %s2422 = sshll.u32 %s2412, 4
          %s2423 = int_to_ptr.vmem [resolvable:$true] %s2422
          %2428 = dma.vmem_to_hbm [thread:$0]  %s2423, 2048, %s2421, %s2409, 128, 128, 8
        $region40: #{tpu_custom_call.1} parent=35 // pred_fallthru
          _
      $region36: #{tpu_custom_call.1} parent=5 // pred_fallthru
        _
      %p2429 = scmp.le.s32.totalorder 2, %s13
      // Predicated region
      $region41: #{tpu_custom_call.1} parent=5 // pred_check
        %p2430 = pneg %p2429
      $region42: #{tpu_custom_call.1} parent=5 // pred_check_branch
        %2432 = sbr.rel (%p2430) target = $region44
      $region43: #{tpu_custom_call.1} parent=5 // pred_region
        %s2433 = ssub.s32 %s13, 2
        // Predicated region
        $region45: #{tpu_custom_call.1} parent=43 // pred_check
          %p2434 = pneg %p141
        $region46: #{tpu_custom_call.1} parent=43 // pred_check_branch
          %2436 = sbr.rel (%p2434) target = $region48
        $region47: #{tpu_custom_call.1} parent=43 // pred_region
          %s2437 = sand.u32 %s126, 1
          %s2438 = scalar_lea.sflag [#allocation3], %s2437
          %s2439 = sand.u32 %s126, 1
          %s2440 = smul.addr %s2439, 128
          %s2441 = scalar_lea.vmem [#allocation2], %s2440
          %2442 = dma.done %s2438, 2048
        $region48: #{tpu_custom_call.1} parent=43 // pred_fallthru
          _
      $region44: #{tpu_custom_call.1} parent=5 // pred_fallthru
        _
    $region6: #{tpu_custom_call.1} parent=1 // loop_footer
      %s17 = sadd.s32 1, %s13
    $region7: #{tpu_custom_call.1} parent=1 // loop_footer_branch
      %12 = sbr.rel target = $region3
    $region8: #{tpu_custom_call.1} parent=1 // loop_exit
      _
    %2443 = vsyncpa [#allocation3], 1
    %s2444 = scalar_lea.sflag [#allocation3], 1
    %2445 = vsyncpa %s2444, 1

</llo_original>
